<compile_context>
chip_gen: v7x
topology: tpu7x:2x2x1
jax: 0.10.0
libtpu: 0.0.40
codegen_flags: <defaults>
</compile_context>

<pallas_src>
import jax
import jax.numpy as jnp
from jax.experimental import pallas as pl
from jax.experimental.pallas import tpu as pltpu

_BN_EPS = 1e-5
_MATMUL_DTYPE = jnp.bfloat16  # MXU operand dtype; accumulation stays f32


def _round_up(n, m=128):
    return ((n + m - 1) // m) * m


def _make_encoder_kernel(num_layers):
    """Fused kernel: num_layers x (Linear(no bias) + BatchNorm1d + ReLU)."""

    def kernel(x_ref, w_ref, bn_ref, o_ref):
        h = x_ref[...]                       # (N, F_pad) bf16
        n = h.shape[0]
        inv_n = 1.0 / n

        for i in range(num_layers):          # static unroll — shapes known at trace time
            w = w_ref[i]                     # (F_pad, F_pad) bf16

            # Linear (no bias; BN mean subtraction cancels it) — MXU bf16, f32 acc.
            y = jnp.dot(h, w, preferred_element_type=jnp.float32)   # (N, F) f32

            # BatchNorm1d training-mode batch statistics, single reduction pass:
            #   mean = E[y], var = E[y^2] - mean^2  (biased variance, like torch).
            # NOTE: single-pass variance is fine for standardized inputs; switch
            # to a shifted/two-pass form if inputs have large per-column means.
            s1 = jnp.sum(y, axis=0, keepdims=True)
            s2 = jnp.sum(y * y, axis=0, keepdims=True)
            mean = s1 * inv_n
            var = jnp.maximum(s2 * inv_n - mean * mean, 0.0)

            # Fold BN affine into per-column scale/shift (all on (1,F) vregs).
            gb = bn_ref[i]                   # (2, F_pad) f32
            gamma = gb[0:1, :]
            beta = gb[1:2, :]
            scale = gamma * jax.lax.rsqrt(var + _BN_EPS)   # rsqrt -> EUP slot
            shift = beta - mean * scale

            # Single fused (N,F) epilogue pass: scale, shift, ReLU.
            a = jnp.maximum(y * scale + shift, 0.0)

            if i + 1 < num_layers:
                h = a.astype(_MATMUL_DTYPE)  # carry bf16 between layers
            else:
                o_ref[...] = a.astype(o_ref.dtype)

    return kernel


def build_encoder_params(key, dimensions, input_size):
    """Padded, bias-free, stacked parameters.

    Linear weight ~ U(-1/sqrt(fan_in), 1/sqrt(fan_in)) (torch default), stored
    transposed as (F_in_pad, F_out_pad), zero-padded to a common 128-multiple
    and stacked into one (L, F_pad, F_pad) bf16 tensor. The linear bias is
    omitted (cancelled exactly by BN's mean subtraction).
    BatchNorm1d: gamma = 1, beta = 0, stacked into one (L, 2, F_pad) f32 tensor.
    Padded columns stay exactly zero end-to-end (zero weights, beta = 0).
    """
    f_pad = max(_round_up(input_size), max(_round_up(d) for d in dimensions))
    w_list, bn_list, w_ref_list = [], [], []
    fan_in = input_size
    for size in dimensions:
        key, kw = jax.random.split(key)
        bound = 1.0 / (fan_in ** 0.5)
        w = jax.random.uniform(kw, (fan_in, size), jnp.float32, -bound, bound)
        w_ref_list.append(w)
        w_pad = jnp.zeros((f_pad, f_pad), jnp.float32).at[:fan_in, :size].set(w)
        w_list.append(w_pad)
        gamma = jnp.zeros((f_pad,), jnp.float32).at[:size].set(1.0)
        beta = jnp.zeros((f_pad,), jnp.float32)
        bn_list.append(jnp.stack([gamma, beta]))
        fan_in = size
    w_stack = jnp.stack(w_list).astype(_MATMUL_DTYPE)   # (L, F_pad, F_pad) bf16
    bn_stack = jnp.stack(bn_list)                       # (L, 2, F_pad) f32
    return w_stack, bn_stack, w_ref_list


def encoder_forward(x, w_stack, bn_stack, latent_dim):
    """Full Encoder forward as ONE fused Pallas kernel; slices padded lanes off."""
    n, f_in = x.shape
    num_layers, f_pad, _ = w_stack.shape

    x_b = x.astype(_MATMUL_DTYPE)
    if f_pad != f_in:
        x_b = jnp.zeros((n, f_pad), _MATMUL_DTYPE).at[:, :f_in].set(x_b)

    out = pl.pallas_call(
        _make_encoder_kernel(num_layers),
        out_shape=jax.ShapeDtypeStruct((n, f_pad), jnp.float32),
        in_specs=[
            pl.BlockSpec((n, f_pad), lambda: (0, 0)),
            pl.BlockSpec((num_layers, f_pad, f_pad), lambda: (0, 0, 0)),
            pl.BlockSpec((num_layers, 2, f_pad), lambda: (0, 0, 0)),
        ],
        out_specs=pl.BlockSpec((n, f_pad), lambda: (0, 0)),
        compiler_params=pltpu.CompilerParams(vmem_limit_bytes=4 * 1024 * 1024),
    )(x_b, w_stack, bn_stack)

    # Drop the zero-padded feature lanes (padded columns are exactly zero).
    return out[:, :latent_dim]


def encoder_reference(x, weights):
    """Pure-JAX f32 reference: Linear(no bias) -> BN(batch stats) -> ReLU, per layer."""
    h = x
    for w in weights:
        y = h @ w
        mean = jnp.mean(y, axis=0, keepdims=True)
        var = jnp.mean((y - mean) ** 2, axis=0, keepdims=True)
        h = jnp.maximum((y - mean) * jax.lax.rsqrt(var + _BN_EPS), 0.0)
    return h


if __name__ == "__main__":
    # Configuration consistent with the module's __init__:
    #   hparams['dimensions'] = [128, 64], latent_dim = 32, input_size = 128
    #   -> filtered dims (> latent_dim) + [latent_dim] = [128, 64, 32]
    input_size = 128
    latent_dim = 32
    hparams = {"dimensions": [128, 64]}

    dimensions = [d for d in hparams["dimensions"] if d > latent_dim]
    dimensions.append(latent_dim)
    assert dimensions[-1] == latent_dim and dimensions[-2] > latent_dim
    assert dimensions[0] == input_size

    key = jax.random.PRNGKey(0)
    key, kx = jax.random.split(key)

    # Batch = 256 fills the MXU M-dimension on v6e/v7x (v5e runs two M-passes);
    # BN still uses exact full-batch statistics (whole batch in one block).
    batch = 256
    x = jax.random.normal(kx, (batch, input_size), jnp.float32)

    w_stack, bn_stack, w_ref_list = build_encoder_params(key, dimensions, input_size)

    out = encoder_forward(x, w_stack, bn_stack, latent_dim)
    out = jax.block_until_ready(out)

    assert out.shape == (batch, latent_dim), out.shape
    assert out.dtype == jnp.float32

    # Tolerance-based check vs f32 reference (bf16 matmul operands -> ~1e-2 level).
    ref = encoder_reference(x, w_ref_list)[:, :latent_dim]
    max_err = float(jnp.max(jnp.abs(out - ref)))
    assert max_err < 0.15, f"max abs error {max_err}"

    print("KERNEL_OK")
</pallas_src>

<mosaic_0001>
module attributes {stable_mosaic.version = 11 : i64} {
  func.func @kernel(%arg0: memref<256x128xbf16, #tpu.memory_space<vmem>>, %arg1: memref<3x128x128xbf16, #tpu.memory_space<vmem>>, %arg2: memref<3x2x128xf32, #tpu.memory_space<vmem>>, %arg3: memref<256x128xf32, #tpu.memory_space<vmem>>) attributes {dimension_semantics = [], scalar_prefetch = 0 : i64, scratch_operands = 0 : i64, tpu.core_type = #tpu.core_type<tc>} {
    %c0 = arith.constant 0 : index
    %c0_0 = arith.constant 0 : index
    %0 = vector.load %arg0[%c0, %c0_0] : memref<256x128xbf16, #tpu.memory_space<vmem>>, vector<256x128xbf16>
    %c0_1 = arith.constant 0 : index
    %c0_2 = arith.constant 0 : index
    %c0_3 = arith.constant 0 : index
    %1 = vector.load %arg1[%c0_1, %c0_2, %c0_3] : memref<3x128x128xbf16, #tpu.memory_space<vmem>>, vector<1x128x128xbf16>
    %2 = vector.shape_cast %1 : vector<1x128x128xbf16> to vector<128x128xbf16>
    %cst = arith.constant dense<0.000000e+00> : vector<256x128xf32>
    %3 = tpu.matmul %0, %2, %cst {dimension_numbers = #tpu.dot_dimension_numbers<[1], [0], [0], [1], [0, 0, 1, 1], [], []>} : vector<256x128xbf16>, vector<128x128xbf16>, vector<256x128xf32> -> vector<256x128xf32>
    %cst_4 = arith.constant dense<0.000000e+00> : vector<128xf32>
    %4 = vector.multi_reduction <add>, %3, %cst_4 [0] : vector<256x128xf32> to vector<128xf32>
    %5 = vector.shape_cast %4 : vector<128xf32> to vector<1x128xf32>
    %6 = arith.mulf %3, %3 : vector<256x128xf32>
    %cst_5 = arith.constant dense<0.000000e+00> : vector<128xf32>
    %7 = vector.multi_reduction <add>, %6, %cst_5 [0] : vector<256x128xf32> to vector<128xf32>
    %8 = vector.shape_cast %7 : vector<128xf32> to vector<1x128xf32>
    %cst_6 = arith.constant 3.906250e-03 : f32
    %9 = vector.broadcast %cst_6 : f32 to vector<1x128xf32>
    %10 = arith.mulf %5, %9 : vector<1x128xf32>
    %cst_7 = arith.constant 3.906250e-03 : f32
    %11 = vector.broadcast %cst_7 : f32 to vector<1x128xf32>
    %12 = arith.mulf %8, %11 : vector<1x128xf32>
    %13 = arith.mulf %10, %10 : vector<1x128xf32>
    %14 = arith.subf %12, %13 : vector<1x128xf32>
    %cst_8 = arith.constant 0.000000e+00 : f32
    %15 = vector.broadcast %cst_8 : f32 to vector<1x128xf32>
    %16 = arith.maximumf %14, %15 : vector<1x128xf32>
    %c0_9 = arith.constant 0 : index
    %c0_10 = arith.constant 0 : index
    %c0_11 = arith.constant 0 : index
    %17 = vector.load %arg2[%c0_9, %c0_10, %c0_11] : memref<3x2x128xf32, #tpu.memory_space<vmem>>, vector<1x2x128xf32>
    %18 = vector.shape_cast %17 : vector<1x2x128xf32> to vector<2x128xf32>
    %19 = vector.extract_strided_slice %18 {offsets = [0, 0], sizes = [1, 128], strides = [1, 1]} : vector<2x128xf32> to vector<1x128xf32>
    %20 = vector.extract_strided_slice %18 {offsets = [1, 0], sizes = [1, 128], strides = [1, 1]} : vector<2x128xf32> to vector<1x128xf32>
    %cst_12 = arith.constant 9.99999974E-6 : f32
    %21 = vector.broadcast %cst_12 : f32 to vector<1x128xf32>
    %22 = arith.addf %16, %21 : vector<1x128xf32>
    %23 = math.rsqrt %22 : vector<1x128xf32>
    %24 = arith.mulf %19, %23 : vector<1x128xf32>
    %25 = arith.mulf %10, %24 : vector<1x128xf32>
    %26 = arith.subf %20, %25 : vector<1x128xf32>
    %27 = vector.broadcast %24 : vector<1x128xf32> to vector<256x128xf32>
    %28 = arith.mulf %3, %27 : vector<256x128xf32>
    %29 = vector.broadcast %26 : vector<1x128xf32> to vector<256x128xf32>
    %30 = arith.addf %28, %29 : vector<256x128xf32>
    %cst_13 = arith.constant 0.000000e+00 : f32
    %31 = vector.broadcast %cst_13 : f32 to vector<256x128xf32>
    %32 = arith.maximumf %30, %31 : vector<256x128xf32>
    %33 = arith.truncf %32 : vector<256x128xf32> to vector<256x128xbf16>
    %c1 = arith.constant 1 : index
    %c0_14 = arith.constant 0 : index
    %c0_15 = arith.constant 0 : index
    %34 = vector.load %arg1[%c1, %c0_14, %c0_15] : memref<3x128x128xbf16, #tpu.memory_space<vmem>>, vector<1x128x128xbf16>
    %35 = vector.shape_cast %34 : vector<1x128x128xbf16> to vector<128x128xbf16>
    %cst_16 = arith.constant dense<0.000000e+00> : vector<256x128xf32>
    %36 = tpu.matmul %33, %35, %cst_16 {dimension_numbers = #tpu.dot_dimension_numbers<[1], [0], [0], [1], [0, 0, 1, 1], [], []>} : vector<256x128xbf16>, vector<128x128xbf16>, vector<256x128xf32> -> vector<256x128xf32>
    %cst_17 = arith.constant dense<0.000000e+00> : vector<128xf32>
    %37 = vector.multi_reduction <add>, %36, %cst_17 [0] : vector<256x128xf32> to vector<128xf32>
    %38 = vector.shape_cast %37 : vector<128xf32> to vector<1x128xf32>
    %39 = arith.mulf %36, %36 : vector<256x128xf32>
    %cst_18 = arith.constant dense<0.000000e+00> : vector<128xf32>
    %40 = vector.multi_reduction <add>, %39, %cst_18 [0] : vector<256x128xf32> to vector<128xf32>
    %41 = vector.shape_cast %40 : vector<128xf32> to vector<1x128xf32>
    %cst_19 = arith.constant 3.906250e-03 : f32
    %42 = vector.broadcast %cst_19 : f32 to vector<1x128xf32>
    %43 = arith.mulf %38, %42 : vector<1x128xf32>
    %cst_20 = arith.constant 3.906250e-03 : f32
    %44 = vector.broadcast %cst_20 : f32 to vector<1x128xf32>
    %45 = arith.mulf %41, %44 : vector<1x128xf32>
    %46 = arith.mulf %43, %43 : vector<1x128xf32>
    %47 = arith.subf %45, %46 : vector<1x128xf32>
    %cst_21 = arith.constant 0.000000e+00 : f32
    %48 = vector.broadcast %cst_21 : f32 to vector<1x128xf32>
    %49 = arith.maximumf %47, %48 : vector<1x128xf32>
    %c1_22 = arith.constant 1 : index
    %c0_23 = arith.constant 0 : index
    %c0_24 = arith.constant 0 : index
    %50 = vector.load %arg2[%c1_22, %c0_23, %c0_24] : memref<3x2x128xf32, #tpu.memory_space<vmem>>, vector<1x2x128xf32>
    %51 = vector.shape_cast %50 : vector<1x2x128xf32> to vector<2x128xf32>
    %52 = vector.extract_strided_slice %51 {offsets = [0, 0], sizes = [1, 128], strides = [1, 1]} : vector<2x128xf32> to vector<1x128xf32>
    %53 = vector.extract_strided_slice %51 {offsets = [1, 0], sizes = [1, 128], strides = [1, 1]} : vector<2x128xf32> to vector<1x128xf32>
    %cst_25 = arith.constant 9.99999974E-6 : f32
    %54 = vector.broadcast %cst_25 : f32 to vector<1x128xf32>
    %55 = arith.addf %49, %54 : vector<1x128xf32>
    %56 = math.rsqrt %55 : vector<1x128xf32>
    %57 = arith.mulf %52, %56 : vector<1x128xf32>
    %58 = arith.mulf %43, %57 : vector<1x128xf32>
    %59 = arith.subf %53, %58 : vector<1x128xf32>
    %60 = vector.broadcast %57 : vector<1x128xf32> to vector<256x128xf32>
    %61 = arith.mulf %36, %60 : vector<256x128xf32>
    %62 = vector.broadcast %59 : vector<1x128xf32> to vector<256x128xf32>
    %63 = arith.addf %61, %62 : vector<256x128xf32>
    %cst_26 = arith.constant 0.000000e+00 : f32
    %64 = vector.broadcast %cst_26 : f32 to vector<256x128xf32>
    %65 = arith.maximumf %63, %64 : vector<256x128xf32>
    %66 = arith.truncf %65 : vector<256x128xf32> to vector<256x128xbf16>
    %c2 = arith.constant 2 : index
    %c0_27 = arith.constant 0 : index
    %c0_28 = arith.constant 0 : index
    %67 = vector.load %arg1[%c2, %c0_27, %c0_28] : memref<3x128x128xbf16, #tpu.memory_space<vmem>>, vector<1x128x128xbf16>
    %68 = vector.shape_cast %67 : vector<1x128x128xbf16> to vector<128x128xbf16>
    %cst_29 = arith.constant dense<0.000000e+00> : vector<256x128xf32>
    %69 = tpu.matmul %66, %68, %cst_29 {dimension_numbers = #tpu.dot_dimension_numbers<[1], [0], [0], [1], [0, 0, 1, 1], [], []>} : vector<256x128xbf16>, vector<128x128xbf16>, vector<256x128xf32> -> vector<256x128xf32>
    %cst_30 = arith.constant dense<0.000000e+00> : vector<128xf32>
    %70 = vector.multi_reduction <add>, %69, %cst_30 [0] : vector<256x128xf32> to vector<128xf32>
    %71 = vector.shape_cast %70 : vector<128xf32> to vector<1x128xf32>
    %72 = arith.mulf %69, %69 : vector<256x128xf32>
    %cst_31 = arith.constant dense<0.000000e+00> : vector<128xf32>
    %73 = vector.multi_reduction <add>, %72, %cst_31 [0] : vector<256x128xf32> to vector<128xf32>
    %74 = vector.shape_cast %73 : vector<128xf32> to vector<1x128xf32>
    %cst_32 = arith.constant 3.906250e-03 : f32
    %75 = vector.broadcast %cst_32 : f32 to vector<1x128xf32>
    %76 = arith.mulf %71, %75 : vector<1x128xf32>
    %cst_33 = arith.constant 3.906250e-03 : f32
    %77 = vector.broadcast %cst_33 : f32 to vector<1x128xf32>
    %78 = arith.mulf %74, %77 : vector<1x128xf32>
    %79 = arith.mulf %76, %76 : vector<1x128xf32>
    %80 = arith.subf %78, %79 : vector<1x128xf32>
    %cst_34 = arith.constant 0.000000e+00 : f32
    %81 = vector.broadcast %cst_34 : f32 to vector<1x128xf32>
    %82 = arith.maximumf %80, %81 : vector<1x128xf32>
    %c2_35 = arith.constant 2 : index
    %c0_36 = arith.constant 0 : index
    %c0_37 = arith.constant 0 : index
    %83 = vector.load %arg2[%c2_35, %c0_36, %c0_37] : memref<3x2x128xf32, #tpu.memory_space<vmem>>, vector<1x2x128xf32>
    %84 = vector.shape_cast %83 : vector<1x2x128xf32> to vector<2x128xf32>
    %85 = vector.extract_strided_slice %84 {offsets = [0, 0], sizes = [1, 128], strides = [1, 1]} : vector<2x128xf32> to vector<1x128xf32>
    %86 = vector.extract_strided_slice %84 {offsets = [1, 0], sizes = [1, 128], strides = [1, 1]} : vector<2x128xf32> to vector<1x128xf32>
    %cst_38 = arith.constant 9.99999974E-6 : f32
    %87 = vector.broadcast %cst_38 : f32 to vector<1x128xf32>
    %88 = arith.addf %82, %87 : vector<1x128xf32>
    %89 = math.rsqrt %88 : vector<1x128xf32>
    %90 = arith.mulf %85, %89 : vector<1x128xf32>
    %91 = arith.mulf %76, %90 : vector<1x128xf32>
    %92 = arith.subf %86, %91 : vector<1x128xf32>
    %93 = vector.broadcast %90 : vector<1x128xf32> to vector<256x128xf32>
    %94 = arith.mulf %69, %93 : vector<256x128xf32>
    %95 = vector.broadcast %92 : vector<1x128xf32> to vector<256x128xf32>
    %96 = arith.addf %94, %95 : vector<256x128xf32>
    %cst_39 = arith.constant 0.000000e+00 : f32
    %97 = vector.broadcast %cst_39 : f32 to vector<256x128xf32>
    %98 = arith.maximumf %96, %97 : vector<256x128xf32>
    %c0_40 = arith.constant 0 : index
    %c0_41 = arith.constant 0 : index
    %99 = vector.load %arg3[%c0_40, %c0_41] : memref<256x128xf32, #tpu.memory_space<vmem>>, vector<256x128xf32>
    tpu.vector_store %arg3[%c0_40, %c0_41], %98 {strides = array<i32>} : memref<256x128xf32, #tpu.memory_space<vmem>>, vector<256x128xf32>,
    return
  }
}

</mosaic_0001>

<llo_original>
// kernel: tpu_custom_call.1
$region0: #{tpu_custom_call.1}
  #allocation0 [shape = 'u32[]', space=smem, size = 0x4, offset = 0x4, fixed_abs, tag = 'smem constant byte address 0x4 - core index']
  #allocation1 [shape = 'u32[144,128]{1,0:T(1,128)}', space=vmem, size = 0x12000, scoped, tag = 'internal scratch']
  %s0 = inlined_call_operand.hbm [shape: bf16[256,128], index: 0, kind: input, shape index: {}]
  %s1 = inlined_call_operand.hbm [shape: bf16[3,128,128], index: 1, kind: input, shape index: {}]
  %s2 = inlined_call_operand.vmem [shape: f32[3,2,128], index: 2, kind: input, shape index: {}]
  %s3 = inlined_call_operand.hbm [shape: f32[256,128], index: 3, kind: output, shape index: {}]
  %s4 = sld [smem:[#allocation0]]
  $region30: #{tpu_custom_call.1} parent=0
    _
  %s6 = ssub.s32 1, %s4
  %s7 = scalar_select 0, %s6, %s4
  $region1: #{tpu_custom_call.1} parent=0
    #allocation2 [shape = 'u8[65536]{0}', space=vmem, size = 0x10000, scoped, tag = 'input window, operand 0, single buffered']
    #allocation3 [shape = 's32[1]{0}', space=sflag, size = 0x4, scoped, tag = 'scoped memory for tpu_custom_call.1']
    #allocation4 [shape = 's32[1]{0}', space=sflag, size = 0x4, scoped, tag = 'scoped memory for tpu_custom_call.1']
    #allocation5 [shape = 'u8[98304]{0}', space=vmem, size = 0x18000, scoped, tag = 'input window, operand 1, single buffered']
    #allocation6 [shape = 's32[1]{0}', space=sflag, size = 0x4, scoped, tag = 'scoped memory for tpu_custom_call.1']
    #allocation7 [shape = 'u8[131072]{0}', space=vmem, size = 0x20000, scoped, tag = 'output window, operand 0, single buffered']
    %8 = vsyncpa [#allocation3], 0
    %9 = vsyncpa [#allocation6], 0
    %10 = vsyncpa [#allocation4], 0
    // Predicated region
    $region2: #{tpu_custom_call.1} parent=1 // pred_check
      _
    $region3: #{tpu_custom_call.1} parent=1 // pred_check_branch
      %12 = sbr.rel (0) target = $region5
    $region4: #{tpu_custom_call.1} parent=1 // pred_region
      %s14 = ssub.s32 2048, 2048
      %15 = vsyncadd [#allocation3], %s14
      %s16 = sshll.u32 [#allocation2], 4
      %s17 = int_to_ptr.vmem [resolvable:$true] %s16
      %22 = dma.hbm_to_vmem [thread:$0]  %s0, 2048, %s17, [#allocation3], 64, 64, 4
    $region5: #{tpu_custom_call.1} parent=1 // pred_fallthru
      _
    // Predicated region
    $region6: #{tpu_custom_call.1} parent=1 // pred_check
      _
    $region7: #{tpu_custom_call.1} parent=1 // pred_check_branch
      %24 = sbr.rel (0) target = $region9
    $region8: #{tpu_custom_call.1} parent=1 // pred_region
      %s26 = ssub.s32 3072, 3072
      %27 = vsyncadd [#allocation6], %s26
      %s28 = sshll.u32 [#allocation5], 4
      %s29 = int_to_ptr.vmem [resolvable:$true] %s28
      %34 = dma.hbm_to_vmem [thread:$0]  %s1, 3072, %s29, [#allocation6], 64, 64, 4
    $region9: #{tpu_custom_call.1} parent=1 // pred_fallthru
      _
    // Predicated region
    $region10: #{tpu_custom_call.1} parent=1 // pred_check
      _
    $region11: #{tpu_custom_call.1} parent=1 // pred_check_branch
      %36 = sbr.rel (0) target = $region13
    $region12: #{tpu_custom_call.1} parent=1 // pred_region
      _
    $region13: #{tpu_custom_call.1} parent=1 // pred_fallthru
      _
    // Predicated region
    $region14: #{tpu_custom_call.1} parent=1 // pred_check
      _
    $region15: #{tpu_custom_call.1} parent=1 // pred_check_branch
      %38 = sbr.rel (0) target = $region17
    $region16: #{tpu_custom_call.1} parent=1 // pred_region
      %39 = dma.done [#allocation3], 2048
    $region17: #{tpu_custom_call.1} parent=1 // pred_fallthru
      _
    // Predicated region
    $region18: #{tpu_custom_call.1} parent=1 // pred_check
      _
    $region19: #{tpu_custom_call.1} parent=1 // pred_check_branch
      %41 = sbr.rel (0) target = $region21
    $region20: #{tpu_custom_call.1} parent=1 // pred_region
      %42 = dma.done [#allocation6], 3072
    $region21: #{tpu_custom_call.1} parent=1 // pred_fallthru
      _
    %v44 = vld [vmem:[#allocation2] sm:$0xf]
    %v45 = vld [vmem:[#allocation2 + $0x4] sm:$0xf]
    %v46 = vld [vmem:[#allocation2 + $0x8] sm:$0xf]
    %v47 = vld [vmem:[#allocation2 + $0xc] sm:$0xf]
    %v48 = vld [vmem:[#allocation2 + $0x10] sm:$0xf]
    %v49 = vld [vmem:[#allocation2 + $0x14] sm:$0xf]
    %v50 = vld [vmem:[#allocation2 + $0x18] sm:$0xf]
    %v51 = vld [vmem:[#allocation2 + $0x1c] sm:$0xf]
    %v52 = vld [vmem:[#allocation2 + $0x20] sm:$0xf]
    %v53 = vld [vmem:[#allocation2 + $0x24] sm:$0xf]
    %v54 = vld [vmem:[#allocation2 + $0x28] sm:$0xf]
    %v55 = vld [vmem:[#allocation2 + $0x2c] sm:$0xf]
    %v56 = vld [vmem:[#allocation2 + $0x30] sm:$0xf]
    %v57 = vld [vmem:[#allocation2 + $0x34] sm:$0xf]
    %v58 = vld [vmem:[#allocation2 + $0x38] sm:$0xf]
    %v59 = vld [vmem:[#allocation2 + $0x3c] sm:$0xf]
    %v60 = vld [vmem:[#allocation2 + $0x40] sm:$0xf]
    %v61 = vld [vmem:[#allocation2 + $0x44] sm:$0xf]
    %v62 = vld [vmem:[#allocation2 + $0x48] sm:$0xf]
    %v63 = vld [vmem:[#allocation2 + $0x4c] sm:$0xf]
    %v64 = vld [vmem:[#allocation2 + $0x50] sm:$0xf]
    %v65 = vld [vmem:[#allocation2 + $0x54] sm:$0xf]
    %v66 = vld [vmem:[#allocation2 + $0x58] sm:$0xf]
    %v67 = vld [vmem:[#allocation2 + $0x5c] sm:$0xf]
    %v68 = vld [vmem:[#allocation2 + $0x60] sm:$0xf]
    %v69 = vld [vmem:[#allocation2 + $0x64] sm:$0xf]
    %v70 = vld [vmem:[#allocation2 + $0x68] sm:$0xf]
    %v71 = vld [vmem:[#allocation2 + $0x6c] sm:$0xf]
    %v72 = vld [vmem:[#allocation2 + $0x70] sm:$0xf]
    %v73 = vld [vmem:[#allocation2 + $0x74] sm:$0xf]
    %v74 = vld [vmem:[#allocation2 + $0x78] sm:$0xf]
    %v75 = vld [vmem:[#allocation2 + $0x7c] sm:$0xf]
    %v76 = vld [vmem:[#allocation5] sm:$0xf]
    %v77 = vld [vmem:[#allocation5 + $0x4] sm:$0xf]
    %v78 = vld [vmem:[#allocation5 + $0x8] sm:$0xf]
    %v79 = vld [vmem:[#allocation5 + $0xc] sm:$0xf]
    %v80 = vld [vmem:[#allocation5 + $0x10] sm:$0xf]
    %v81 = vld [vmem:[#allocation5 + $0x14] sm:$0xf]
    %v82 = vld [vmem:[#allocation5 + $0x18] sm:$0xf]
    %v83 = vld [vmem:[#allocation5 + $0x1c] sm:$0xf]
    %v84 = vld [vmem:[#allocation5 + $0x20] sm:$0xf]
    %v85 = vld [vmem:[#allocation5 + $0x24] sm:$0xf]
    %v86 = vld [vmem:[#allocation5 + $0x28] sm:$0xf]
    %v87 = vld [vmem:[#allocation5 + $0x2c] sm:$0xf]
    %v88 = vld [vmem:[#allocation5 + $0x30] sm:$0xf]
    %v89 = vld [vmem:[#allocation5 + $0x34] sm:$0xf]
    %v90 = vld [vmem:[#allocation5 + $0x38] sm:$0xf]
    %v91 = vld [vmem:[#allocation5 + $0x3c] sm:$0xf]
    %v124 = vunpack.c.l.b16 %v44
    %v125 = vunpack.c.l.b16 %v45
    %v126 = vunpack.c.l.b16 %v46
    %v127 = vunpack.c.l.b16 %v47
    %v128 = vunpack.c.l.b16 %v48
    %v129 = vunpack.c.l.b16 %v49
    %v130 = vunpack.c.l.b16 %v50
    %v131 = vunpack.c.l.b16 %v51
    %v132 = vunpack.c.l.b16 %v52
    %v133 = vunpack.c.l.b16 %v53
    %v134 = vunpack.c.l.b16 %v54
    %v135 = vunpack.c.l.b16 %v55
    %v136 = vunpack.c.l.b16 %v56
    %v137 = vunpack.c.l.b16 %v57
    %v138 = vunpack.c.l.b16 %v58
    %v139 = vunpack.c.l.b16 %v59
    %v140 = vunpack.c.l.b16 %v60
    %v141 = vunpack.c.l.b16 %v61
    %v142 = vunpack.c.l.b16 %v62
    %v143 = vunpack.c.l.b16 %v63
    %v144 = vunpack.c.l.b16 %v64
    %v145 = vunpack.c.l.b16 %v65
    %v146 = vunpack.c.l.b16 %v66
    %v147 = vunpack.c.l.b16 %v67
    %v148 = vunpack.c.l.b16 %v68
    %v149 = vunpack.c.l.b16 %v69
    %v150 = vunpack.c.l.b16 %v70
    %v151 = vunpack.c.l.b16 %v71
    %v152 = vunpack.c.l.b16 %v72
    %v153 = vunpack.c.l.b16 %v73
    %v154 = vunpack.c.l.b16 %v74
    %v155 = vunpack.c.l.b16 %v75
    %v156 = vpack.c.b16 %v125, %v124
    %v157 = vpack.c.b16 %v127, %v126
    %v158 = vpack.c.b16 %v129, %v128
    %v159 = vpack.c.b16 %v131, %v130
    %v160 = vpack.c.b16 %v133, %v132
    %v161 = vpack.c.b16 %v135, %v134
    %v162 = vpack.c.b16 %v137, %v136
    %v163 = vpack.c.b16 %v139, %v138
    %v164 = vpack.c.b16 %v141, %v140
    %v165 = vpack.c.b16 %v143, %v142
    %v166 = vpack.c.b16 %v145, %v144
    %v167 = vpack.c.b16 %v147, %v146
    %v168 = vpack.c.b16 %v149, %v148
    %v169 = vpack.c.b16 %v151, %v150
    %v170 = vpack.c.b16 %v153, %v152
    %v171 = vpack.c.b16 %v155, %v154
    %v204 = vunpack.c.l.b16 %v76
    %v205 = vunpack.c.l.b16 %v77
    %v206 = vunpack.c.l.b16 %v78
    %v207 = vunpack.c.l.b16 %v79
    %v208 = vunpack.c.l.b16 %v80
    %v209 = vunpack.c.l.b16 %v81
    %v210 = vunpack.c.l.b16 %v82
    %v211 = vunpack.c.l.b16 %v83
    %v212 = vunpack.c.l.b16 %v84
    %v213 = vunpack.c.l.b16 %v85
    %v214 = vunpack.c.l.b16 %v86
    %v215 = vunpack.c.l.b16 %v87
    %v216 = vunpack.c.l.b16 %v88
    %v217 = vunpack.c.l.b16 %v89
    %v218 = vunpack.c.l.b16 %v90
    %v219 = vunpack.c.l.b16 %v91
    %v220 = vpack.c.b16 %v205, %v204
    %v221 = vpack.c.b16 %v207, %v206
    %v222 = vpack.c.b16 %v209, %v208
    %v223 = vpack.c.b16 %v211, %v210
    %v224 = vpack.c.b16 %v213, %v212
    %v225 = vpack.c.b16 %v215, %v214
    %v226 = vpack.c.b16 %v217, %v216
    %v227 = vpack.c.b16 %v219, %v218
    %236 = vmatprep.subr.bf16.mxu0 0
    %237 = vmatpush1.bf16.msra.mxu0 %v220
    %238 = vmatprep.subr.bf16.mxu0 0
    %239 = vmatpush1.bf16.msra.mxu0 %v221
    %240 = vmatprep.subr.bf16.mxu0 0
    %241 = vmatpush1.bf16.msra.mxu0 %v222
    %242 = vmatprep.subr.bf16.mxu0 0
    %243 = vmatpush1.bf16.msra.mxu0 %v223
    %244 = vmatprep.subr.bf16.mxu0 0
    %245 = vmatpush1.bf16.msra.mxu0 %v224
    %246 = vmatprep.subr.bf16.mxu0 0
    %247 = vmatpush1.bf16.msra.mxu0 %v225
    %248 = vmatprep.subr.bf16.mxu0 0
    %249 = vmatpush1.bf16.msra.mxu0 %v226
    %250 = vmatprep.subr.bf16.mxu0 0
    %251 = vmatpush1.bf16.msra.mxu0 %v227
    %252 = vmatprep.subr.bf16.mxu0 0
    %253 = vmatpush1.bf16.msra.mxu0 0
    %254 = vmatprep.subr.bf16.mxu0 0
    %255 = vmatpush1.bf16.msra.mxu0 0
    %256 = vmatprep.subr.bf16.mxu0 0
    %257 = vmatpush1.bf16.msra.mxu0 0
    %258 = vmatprep.subr.bf16.mxu0 0
    %259 = vmatpush1.bf16.msra.mxu0 0
    %260 = vmatprep.subr.bf16.mxu0 0
    %261 = vmatpush1.bf16.msra.mxu0 0
    %262 = vmatprep.subr.bf16.mxu0 0
    %263 = vmatpush1.bf16.msra.mxu0 0
    %264 = vmatprep.subr.bf16.mxu0 0
    %265 = vmatpush1.bf16.msra.mxu0 0
    %266 = vmatprep.subr.bf16.mxu0 0
    %267 = vmatpush1.bf16.msra.mxu0 0
    %268 = vmatprep.mubr.bf16.mxu0 0
    %269 = vmatmul.mubr.bf16.gmra.mrb[0].mxu0 %v156
    %v270 = vpop.f32.mrb[0].mxu0
    %v271 = vadd.f32 0.0, %v270
    %v272 = vpop.f32.mrb[0].mxu0
    %v273 = vpop.f32.mrb[0].mxu0
    %v274 = vadd.f32 0.0, %v273
    %v275 = vpop.f32.mrb[0].mxu0
    %276 = vmatprep.mubr.bf16.mxu0 0
    %277 = vmatmul.mubr.bf16.gmra.mrb[0].mxu0 %v157
    %v278 = vpop.f32.mrb[0].mxu0
    %v279 = vadd.f32 0.0, %v278
    %v280 = vpop.f32.mrb[0].mxu0
    %v281 = vpop.f32.mrb[0].mxu0
    %v282 = vadd.f32 0.0, %v281
    %v283 = vpop.f32.mrb[0].mxu0
    %284 = vmatprep.mubr.bf16.mxu0 0
    %285 = vmatmul.mubr.bf16.gmra.mrb[0].mxu0 %v158
    %v286 = vpop.f32.mrb[0].mxu0
    %v287 = vadd.f32 0.0, %v286
    %v288 = vpop.f32.mrb[0].mxu0
    %v289 = vpop.f32.mrb[0].mxu0
    %v290 = vadd.f32 0.0, %v289
    %v291 = vpop.f32.mrb[0].mxu0
    %292 = vmatprep.mubr.bf16.mxu0 0
    %293 = vmatmul.mubr.bf16.gmra.mrb[0].mxu0 %v159
    %v294 = vpop.f32.mrb[0].mxu0
    %v295 = vadd.f32 0.0, %v294
    %v296 = vpop.f32.mrb[0].mxu0
    %v297 = vpop.f32.mrb[0].mxu0
    %v298 = vadd.f32 0.0, %v297
    %v299 = vpop.f32.mrb[0].mxu0
    %300 = vmatprep.mubr.bf16.mxu0 0
    %301 = vmatmul.mubr.bf16.gmra.mrb[0].mxu0 %v160
    %v302 = vpop.f32.mrb[0].mxu0
    %v303 = vadd.f32 0.0, %v302
    %v304 = vpop.f32.mrb[0].mxu0
    %v305 = vpop.f32.mrb[0].mxu0
    %v306 = vadd.f32 0.0, %v305
    %v307 = vpop.f32.mrb[0].mxu0
    %308 = vmatprep.mubr.bf16.mxu0 0
    %309 = vmatmul.mubr.bf16.gmra.mrb[0].mxu0 %v161
    %v310 = vpop.f32.mrb[0].mxu0
    %v311 = vadd.f32 0.0, %v310
    %v312 = vpop.f32.mrb[0].mxu0
    %v313 = vpop.f32.mrb[0].mxu0
    %v314 = vadd.f32 0.0, %v313
    %v315 = vpop.f32.mrb[0].mxu0
    %316 = vmatprep.mubr.bf16.mxu0 0
    %317 = vmatmul.mubr.bf16.gmra.mrb[0].mxu0 %v162
    %v318 = vpop.f32.mrb[0].mxu0
    %v319 = vadd.f32 0.0, %v318
    %v320 = vpop.f32.mrb[0].mxu0
    %v321 = vpop.f32.mrb[0].mxu0
    %v322 = vadd.f32 0.0, %v321
    %v323 = vpop.f32.mrb[0].mxu0
    %324 = vmatprep.mubr.bf16.mxu0 0
    %325 = vmatmul.mubr.bf16.gmra.mrb[0].mxu0 %v163
    %v326 = vpop.f32.mrb[0].mxu0
    %v327 = vadd.f32 0.0, %v326
    %v328 = vpop.f32.mrb[0].mxu0
    %v329 = vpop.f32.mrb[0].mxu0
    %v330 = vadd.f32 0.0, %v329
    %v331 = vpop.f32.mrb[0].mxu0
    %332 = vmatprep.mubr.bf16.mxu0 0
    %333 = vmatmul.mubr.bf16.gmra.mrb[0].mxu0 %v164
    %v334 = vpop.f32.mrb[0].mxu0
    %v335 = vadd.f32 0.0, %v334
    %v336 = vpop.f32.mrb[0].mxu0
    %v337 = vpop.f32.mrb[0].mxu0
    %v338 = vadd.f32 0.0, %v337
    %v339 = vpop.f32.mrb[0].mxu0
    %340 = vmatprep.mubr.bf16.mxu0 0
    %341 = vmatmul.mubr.bf16.gmra.mrb[0].mxu0 %v165
    %v342 = vpop.f32.mrb[0].mxu0
    %v343 = vadd.f32 0.0, %v342
    %v344 = vpop.f32.mrb[0].mxu0
    %v345 = vpop.f32.mrb[0].mxu0
    %v346 = vadd.f32 0.0, %v345
    %v347 = vpop.f32.mrb[0].mxu0
    %348 = vmatprep.mubr.bf16.mxu0 0
    %349 = vmatmul.mubr.bf16.gmra.mrb[0].mxu0 %v166
    %v350 = vpop.f32.mrb[0].mxu0
    %v351 = vadd.f32 0.0, %v350
    %v352 = vpop.f32.mrb[0].mxu0
    %v353 = vpop.f32.mrb[0].mxu0
    %v354 = vadd.f32 0.0, %v353
    %v355 = vpop.f32.mrb[0].mxu0
    %356 = vmatprep.mubr.bf16.mxu0 0
    %357 = vmatmul.mubr.bf16.gmra.mrb[0].mxu0 %v167
    %v358 = vpop.f32.mrb[0].mxu0
    %v359 = vadd.f32 0.0, %v358
    %v360 = vpop.f32.mrb[0].mxu0
    %v361 = vpop.f32.mrb[0].mxu0
    %v362 = vadd.f32 0.0, %v361
    %v363 = vpop.f32.mrb[0].mxu0
    %364 = vmatprep.mubr.bf16.mxu0 0
    %365 = vmatmul.mubr.bf16.gmra.mrb[0].mxu0 %v168
    %v366 = vpop.f32.mrb[0].mxu0
    %v367 = vadd.f32 0.0, %v366
    %v368 = vpop.f32.mrb[0].mxu0
    %v369 = vpop.f32.mrb[0].mxu0
    %v370 = vadd.f32 0.0, %v369
    %v371 = vpop.f32.mrb[0].mxu0
    %372 = vmatprep.mubr.bf16.mxu0 0
    %373 = vmatmul.mubr.bf16.gmra.mrb[0].mxu0 %v169
    %v374 = vpop.f32.mrb[0].mxu0
    %v375 = vadd.f32 0.0, %v374
    %v376 = vpop.f32.mrb[0].mxu0
    %v377 = vpop.f32.mrb[0].mxu0
    %v378 = vadd.f32 0.0, %v377
    %v379 = vpop.f32.mrb[0].mxu0
    %380 = vmatprep.mubr.bf16.mxu0 0
    %381 = vmatmul.mubr.bf16.gmra.mrb[0].mxu0 %v170
    %v382 = vpop.f32.mrb[0].mxu0
    %v383 = vadd.f32 0.0, %v382
    %v384 = vpop.f32.mrb[0].mxu0
    %v385 = vpop.f32.mrb[0].mxu0
    %v386 = vadd.f32 0.0, %v385
    %v387 = vpop.f32.mrb[0].mxu0
    %388 = vmatprep.mubr.bf16.mxu0 0
    %389 = vmatmul.mubr.bf16.gmra.mrb[0].mxu0 %v171
    %v390 = vpop.f32.mrb[0].mxu0
    %v391 = vadd.f32 0.0, %v390
    %v392 = vpop.f32.mrb[0].mxu0
    %v393 = vpop.f32.mrb[0].mxu0
    %v394 = vadd.f32 0.0, %v393
    %v395 = vpop.f32.mrb[0].mxu0
    %396 = vdwg.mxu0
    %v397 = vadd.f32 %v271, %v274
    %v398 = vadd.f32 %v397, %v279
    %v399 = vadd.f32 %v398, %v282
    %v400 = vadd.f32 %v399, %v287
    %v401 = vadd.f32 %v400, %v290
    %v402 = vadd.f32 %v401, %v295
    %v403 = vadd.f32 %v402, %v298
    %v404 = vadd.f32 %v403, %v303
    %v405 = vadd.f32 %v404, %v306
    %v406 = vadd.f32 %v405, %v311
    %v407 = vadd.f32 %v406, %v314
    %v408 = vadd.f32 %v407, %v319
    %v409 = vadd.f32 %v408, %v322
    %v410 = vadd.f32 %v409, %v327
    %v411 = vadd.f32 %v410, %v330
    %v412 = vadd.f32 %v411, %v335
    %v413 = vadd.f32 %v412, %v338
    %v414 = vadd.f32 %v413, %v343
    %v415 = vadd.f32 %v414, %v346
    %v416 = vadd.f32 %v415, %v351
    %v417 = vadd.f32 %v416, %v354
    %v418 = vadd.f32 %v417, %v359
    %v419 = vadd.f32 %v418, %v362
    %v420 = vadd.f32 %v419, %v367
    %v421 = vadd.f32 %v420, %v370
    %v422 = vadd.f32 %v421, %v375
    %v423 = vadd.f32 %v422, %v378
    %v424 = vadd.f32 %v423, %v383
    %v425 = vadd.f32 %v424, %v386
    %v426 = vadd.f32 %v425, %v391
    %v427 = vadd.f32 %v426, %v394
    %v428 = vrot.slane %v427, 4
    %v429 = vadd.f32 %v427, %v428
    %v430 = vrot.slane %v429, 2
    %v431 = vadd.f32 %v429, %v430
    %v432 = vrot.slane %v431, 1
    %v433 = vadd.f32 %v431, %v432
    %v434 = vmul.f32 %v271, %v271
    %v435 = vmul.f32 %v274, %v274
    %v436 = vmul.f32 %v279, %v279
    %v437 = vmul.f32 %v282, %v282
    %v438 = vmul.f32 %v287, %v287
    %v439 = vmul.f32 %v290, %v290
    %v440 = vmul.f32 %v295, %v295
    %v441 = vmul.f32 %v298, %v298
    %v442 = vmul.f32 %v303, %v303
    %v443 = vmul.f32 %v306, %v306
    %v444 = vmul.f32 %v311, %v311
    %v445 = vmul.f32 %v314, %v314
    %v446 = vmul.f32 %v319, %v319
    %v447 = vmul.f32 %v322, %v322
    %v448 = vmul.f32 %v327, %v327
    %v449 = vmul.f32 %v330, %v330
    %v450 = vmul.f32 %v335, %v335
    %v451 = vmul.f32 %v338, %v338
    %v452 = vmul.f32 %v343, %v343
    %v453 = vmul.f32 %v346, %v346
    %v454 = vmul.f32 %v351, %v351
    %v455 = vmul.f32 %v354, %v354
    %v456 = vmul.f32 %v359, %v359
    %v457 = vmul.f32 %v362, %v362
    %v458 = vmul.f32 %v367, %v367
    %v459 = vmul.f32 %v370, %v370
    %v460 = vmul.f32 %v375, %v375
    %v461 = vmul.f32 %v378, %v378
    %v462 = vmul.f32 %v383, %v383
    %v463 = vmul.f32 %v386, %v386
    %v464 = vmul.f32 %v391, %v391
    %v465 = vmul.f32 %v394, %v394
    %v466 = vadd.f32 %v434, %v435
    %v467 = vadd.f32 %v466, %v436
    %v468 = vadd.f32 %v467, %v437
    %v469 = vadd.f32 %v468, %v438
    %v470 = vadd.f32 %v469, %v439
    %v471 = vadd.f32 %v470, %v440
    %v472 = vadd.f32 %v471, %v441
    %v473 = vadd.f32 %v472, %v442
    %v474 = vadd.f32 %v473, %v443
    %v475 = vadd.f32 %v474, %v444
    %v476 = vadd.f32 %v475, %v445
    %v477 = vadd.f32 %v476, %v446
    %v478 = vadd.f32 %v477, %v447
    %v479 = vadd.f32 %v478, %v448
    %v480 = vadd.f32 %v479, %v449
    %v481 = vadd.f32 %v480, %v450
    %v482 = vadd.f32 %v481, %v451
    %v483 = vadd.f32 %v482, %v452
    %v484 = vadd.f32 %v483, %v453
    %v485 = vadd.f32 %v484, %v454
    %v486 = vadd.f32 %v485, %v455
    %v487 = vadd.f32 %v486, %v456
    %v488 = vadd.f32 %v487, %v457
    %v489 = vadd.f32 %v488, %v458
    %v490 = vadd.f32 %v489, %v459
    %v491 = vadd.f32 %v490, %v460
    %v492 = vadd.f32 %v491, %v461
    %v493 = vadd.f32 %v492, %v462
    %v494 = vadd.f32 %v493, %v463
    %v495 = vadd.f32 %v494, %v464
    %v496 = vadd.f32 %v495, %v465
    %v497 = vrot.slane %v496, 4
    %v498 = vadd.f32 %v496, %v497
    %v499 = vrot.slane %v498, 2
    %v500 = vadd.f32 %v498, %v499
    %v501 = vrot.slane %v500, 1
    %v502 = vadd.f32 %v500, %v501
    %v503 = vmul.f32 %v433, 0.00390625
    %v504 = vmul.f32 %v502, 0.00390625
    %v505 = vmul.f32 %v503, %v503
    %v506 = vsub.f32 %v504, %v505
    %v507 = vmax.f32 %v506, 0.0
    %v508 = vld [vmem:[%s2] sm:$0x3]
    %v509 = vadd.f32 %v507, 1e-05
    %v510 = vrsqrt.pop %v509
    %v511 = vmul.f32 %v508, %v510
    %v512 = vmul.f32 %v503, %v511
    %v514 = vrot.slane %v512, 7
    %v516 = vsub.f32 %v508, %v514
    %v517 = vlaneseq
    %v518 = vshrl.u32 %v517, 7
    %v519 = vsub.s32 0, %v518
    %v520 = vrot.slane %v511, %v519
    %v521 = vmul.f32 %v271, %v520
    %v522 = vmul.f32 %v274, %v520
    %v523 = vmul.f32 %v279, %v520
    %v524 = vmul.f32 %v282, %v520
    %v525 = vmul.f32 %v287, %v520
    %v526 = vmul.f32 %v290, %v520
    %v527 = vmul.f32 %v295, %v520
    %v528 = vmul.f32 %v298, %v520
    %v529 = vmul.f32 %v303, %v520
    %v530 = vmul.f32 %v306, %v520
    %v531 = vmul.f32 %v311, %v520
    %v532 = vmul.f32 %v314, %v520
    %v533 = vmul.f32 %v319, %v520
    %v534 = vmul.f32 %v322, %v520
    %v535 = vmul.f32 %v327, %v520
    %v536 = vmul.f32 %v330, %v520
    %v537 = vmul.f32 %v335, %v520
    %v538 = vmul.f32 %v338, %v520
    %v539 = vmul.f32 %v343, %v520
    %v540 = vmul.f32 %v346, %v520
    %v541 = vmul.f32 %v351, %v520
    %v542 = vmul.f32 %v354, %v520
    %v543 = vmul.f32 %v359, %v520
    %v544 = vmul.f32 %v362, %v520
    %v545 = vmul.f32 %v367, %v520
    %v546 = vmul.f32 %v370, %v520
    %v547 = vmul.f32 %v375, %v520
    %v548 = vmul.f32 %v378, %v520
    %v549 = vmul.f32 %v383, %v520
    %v550 = vmul.f32 %v386, %v520
    %v551 = vmul.f32 %v391, %v520
    %v552 = vmul.f32 %v394, %v520
    %v553 = vlaneseq
    %v554 = vshrl.u32 %v553, 7
    %v555 = vsub.s32 1, %v554
    %v556 = vrot.slane %v516, %v555
    %v557 = vadd.f32 %v521, %v556
    %v558 = vadd.f32 %v522, %v556
    %v559 = vadd.f32 %v523, %v556
    %v560 = vadd.f32 %v524, %v556
    %v561 = vadd.f32 %v525, %v556
    %v562 = vadd.f32 %v526, %v556
    %v563 = vadd.f32 %v527, %v556
    %v564 = vadd.f32 %v528, %v556
    %v565 = vadd.f32 %v529, %v556
    %v566 = vadd.f32 %v530, %v556
    %v567 = vadd.f32 %v531, %v556
    %v568 = vadd.f32 %v532, %v556
    %v569 = vadd.f32 %v533, %v556
    %v570 = vadd.f32 %v534, %v556
    %v571 = vadd.f32 %v535, %v556
    %v572 = vadd.f32 %v536, %v556
    %v573 = vadd.f32 %v537, %v556
    %v574 = vadd.f32 %v538, %v556
    %v575 = vadd.f32 %v539, %v556
    %v576 = vadd.f32 %v540, %v556
    %v577 = vadd.f32 %v541, %v556
    %v578 = vadd.f32 %v542, %v556
    %v579 = vadd.f32 %v543, %v556
    %v580 = vadd.f32 %v544, %v556
    %v581 = vadd.f32 %v545, %v556
    %v582 = vadd.f32 %v546, %v556
    %v583 = vadd.f32 %v547, %v556
    %v584 = vadd.f32 %v548, %v556
    %v585 = vadd.f32 %v549, %v556
    %v586 = vadd.f32 %v550, %v556
    %v587 = vadd.f32 %v551, %v556
    %v588 = vadd.f32 %v552, %v556
    %v589 = vmax.f32 %v557, 0.0
    %v590 = vmax.f32 %v558, 0.0
    %v591 = vmax.f32 %v559, 0.0
    %v592 = vmax.f32 %v560, 0.0
    %v593 = vmax.f32 %v561, 0.0
    %v594 = vmax.f32 %v562, 0.0
    %v595 = vmax.f32 %v563, 0.0
    %v596 = vmax.f32 %v564, 0.0
    %v597 = vmax.f32 %v565, 0.0
    %v598 = vmax.f32 %v566, 0.0
    %v599 = vmax.f32 %v567, 0.0
    %v600 = vmax.f32 %v568, 0.0
    %v601 = vmax.f32 %v569, 0.0
    %v602 = vmax.f32 %v570, 0.0
    %v603 = vmax.f32 %v571, 0.0
    %v604 = vmax.f32 %v572, 0.0
    %v605 = vmax.f32 %v573, 0.0
    %v606 = vmax.f32 %v574, 0.0
    %v607 = vmax.f32 %v575, 0.0
    %v608 = vmax.f32 %v576, 0.0
    %v609 = vmax.f32 %v577, 0.0
    %v610 = vmax.f32 %v578, 0.0
    %v611 = vmax.f32 %v579, 0.0
    %v612 = vmax.f32 %v580, 0.0
    %v613 = vmax.f32 %v581, 0.0
    %v614 = vmax.f32 %v582, 0.0
    %v615 = vmax.f32 %v583, 0.0
    %v616 = vmax.f32 %v584, 0.0
    %v617 = vmax.f32 %v585, 0.0
    %v618 = vmax.f32 %v586, 0.0
    %v619 = vmax.f32 %v587, 0.0
    %v620 = vmax.f32 %v588, 0.0
    %v621 = vpack.c.bf16 %v590, %v589
    %v622 = vpack.c.bf16 %v592, %v591
    %v623 = vpack.c.bf16 %v594, %v593
    %v624 = vpack.c.bf16 %v596, %v595
    %v625 = vpack.c.bf16 %v598, %v597
    %v626 = vpack.c.bf16 %v600, %v599
    %v627 = vpack.c.bf16 %v602, %v601
    %v628 = vpack.c.bf16 %v604, %v603
    %v629 = vpack.c.bf16 %v606, %v605
    %v630 = vpack.c.bf16 %v608, %v607
    %v631 = vpack.c.bf16 %v610, %v609
    %v632 = vpack.c.bf16 %v612, %v611
    %v633 = vpack.c.bf16 %v614, %v613
    %v634 = vpack.c.bf16 %v616, %v615
    %v635 = vpack.c.bf16 %v618, %v617
    %v636 = vpack.c.bf16 %v620, %v619
    %s637 = scalar_lea.vmem [#allocation5], 64
    %v638 = vld [vmem:[%s637] sm:$0xf]
    %v639 = vld [vmem:[%s637 + $0x4] sm:$0xf]
    %v640 = vld [vmem:[%s637 + $0x8] sm:$0xf]
    %v641 = vld [vmem:[%s637 + $0xc] sm:$0xf]
    %v642 = vld [vmem:[%s637 + $0x10] sm:$0xf]
    %v643 = vld [vmem:[%s637 + $0x14] sm:$0xf]
    %v644 = vld [vmem:[%s637 + $0x18] sm:$0xf]
    %v645 = vld [vmem:[%s637 + $0x1c] sm:$0xf]
    %v646 = vld [vmem:[%s637 + $0x20] sm:$0xf]
    %v647 = vld [vmem:[%s637 + $0x24] sm:$0xf]
    %v648 = vld [vmem:[%s637 + $0x28] sm:$0xf]
    %v649 = vld [vmem:[%s637 + $0x2c] sm:$0xf]
    %v650 = vld [vmem:[%s637 + $0x30] sm:$0xf]
    %v651 = vld [vmem:[%s637 + $0x34] sm:$0xf]
    %v652 = vld [vmem:[%s637 + $0x38] sm:$0xf]
    %v653 = vld [vmem:[%s637 + $0x3c] sm:$0xf]
    %v670 = vunpack.c.l.b16 %v638
    %v671 = vunpack.c.l.b16 %v639
    %v672 = vunpack.c.l.b16 %v640
    %v673 = vunpack.c.l.b16 %v641
    %v674 = vunpack.c.l.b16 %v642
    %v675 = vunpack.c.l.b16 %v643
    %v676 = vunpack.c.l.b16 %v644
    %v677 = vunpack.c.l.b16 %v645
    %v678 = vunpack.c.l.b16 %v646
    %v679 = vunpack.c.l.b16 %v647
    %v680 = vunpack.c.l.b16 %v648
    %v681 = vunpack.c.l.b16 %v649
    %v682 = vunpack.c.l.b16 %v650
    %v683 = vunpack.c.l.b16 %v651
    %v684 = vunpack.c.l.b16 %v652
    %v685 = vunpack.c.l.b16 %v653
    %v686 = vpack.c.b16 %v671, %v670
    %v687 = vpack.c.b16 %v673, %v672
    %v688 = vpack.c.b16 %v675, %v674
    %v689 = vpack.c.b16 %v677, %v676
    %v690 = vpack.c.b16 %v679, %v678
    %v691 = vpack.c.b16 %v681, %v680
    %v692 = vpack.c.b16 %v683, %v682
    %v693 = vpack.c.b16 %v685, %v684
    %702 = vmatprep.subr.bf16.mxu0 0
    %703 = vmatpush1.bf16.msra.mxu0 %v686
    %704 = vmatprep.subr.bf16.mxu0 0
    %705 = vmatpush1.bf16.msra.mxu0 %v687
    %706 = vmatprep.subr.bf16.mxu0 0
    %707 = vmatpush1.bf16.msra.mxu0 %v688
    %708 = vmatprep.subr.bf16.mxu0 0
    %709 = vmatpush1.bf16.msra.mxu0 %v689
    %710 = vmatprep.subr.bf16.mxu0 0
    %711 = vmatpush1.bf16.msra.mxu0 %v690
    %712 = vmatprep.subr.bf16.mxu0 0
    %713 = vmatpush1.bf16.msra.mxu0 %v691
    %714 = vmatprep.subr.bf16.mxu0 0
    %715 = vmatpush1.bf16.msra.mxu0 %v692
    %716 = vmatprep.subr.bf16.mxu0 0
    %717 = vmatpush1.bf16.msra.mxu0 %v693
    %718 = vmatprep.subr.bf16.mxu0 0
    %719 = vmatpush1.bf16.msra.mxu0 0
    %720 = vmatprep.subr.bf16.mxu0 0
    %721 = vmatpush1.bf16.msra.mxu0 0
    %722 = vmatprep.subr.bf16.mxu0 0
    %723 = vmatpush1.bf16.msra.mxu0 0
    %724 = vmatprep.subr.bf16.mxu0 0
    %725 = vmatpush1.bf16.msra.mxu0 0
    %726 = vmatprep.subr.bf16.mxu0 0
    %727 = vmatpush1.bf16.msra.mxu0 0
    %728 = vmatprep.subr.bf16.mxu0 0
    %729 = vmatpush1.bf16.msra.mxu0 0
    %730 = vmatprep.subr.bf16.mxu0 0
    %731 = vmatpush1.bf16.msra.mxu0 0
    %732 = vmatprep.subr.bf16.mxu0 0
    %733 = vmatpush1.bf16.msra.mxu0 0
    %734 = vmatprep.mubr.bf16.mxu0 0
    %735 = vmatmul.mubr.bf16.gmra.mrb[0].mxu0 %v621
    %v736 = vpop.f32.mrb[0].mxu0
    %v737 = vadd.f32 0.0, %v736
    %v738 = vpop.f32.mrb[0].mxu0
    %v739 = vpop.f32.mrb[0].mxu0
    %v740 = vadd.f32 0.0, %v739
    %v741 = vpop.f32.mrb[0].mxu0
    %742 = vmatprep.mubr.bf16.mxu0 0
    %743 = vmatmul.mubr.bf16.gmra.mrb[0].mxu0 %v622
    %v744 = vpop.f32.mrb[0].mxu0
    %v745 = vadd.f32 0.0, %v744
    %v746 = vpop.f32.mrb[0].mxu0
    %v747 = vpop.f32.mrb[0].mxu0
    %v748 = vadd.f32 0.0, %v747
    %v749 = vpop.f32.mrb[0].mxu0
    %750 = vmatprep.mubr.bf16.mxu0 0
    %751 = vmatmul.mubr.bf16.gmra.mrb[0].mxu0 %v623
    %v752 = vpop.f32.mrb[0].mxu0
    %v753 = vadd.f32 0.0, %v752
    %v754 = vpop.f32.mrb[0].mxu0
    %v755 = vpop.f32.mrb[0].mxu0
    %v756 = vadd.f32 0.0, %v755
    %v757 = vpop.f32.mrb[0].mxu0
    %758 = vmatprep.mubr.bf16.mxu0 0
    %759 = vmatmul.mubr.bf16.gmra.mrb[0].mxu0 %v624
    %v760 = vpop.f32.mrb[0].mxu0
    %v761 = vadd.f32 0.0, %v760
    %v762 = vpop.f32.mrb[0].mxu0
    %v763 = vpop.f32.mrb[0].mxu0
    %v764 = vadd.f32 0.0, %v763
    %v765 = vpop.f32.mrb[0].mxu0
    %766 = vmatprep.mubr.bf16.mxu0 0
    %767 = vmatmul.mubr.bf16.gmra.mrb[0].mxu0 %v625
    %v768 = vpop.f32.mrb[0].mxu0
    %v769 = vadd.f32 0.0, %v768
    %v770 = vpop.f32.mrb[0].mxu0
    %v771 = vpop.f32.mrb[0].mxu0
    %v772 = vadd.f32 0.0, %v771
    %v773 = vpop.f32.mrb[0].mxu0
    %774 = vmatprep.mubr.bf16.mxu0 0
    %775 = vmatmul.mubr.bf16.gmra.mrb[0].mxu0 %v626
    %v776 = vpop.f32.mrb[0].mxu0
    %v777 = vadd.f32 0.0, %v776
    %v778 = vpop.f32.mrb[0].mxu0
    %v779 = vpop.f32.mrb[0].mxu0
    %v780 = vadd.f32 0.0, %v779
    %v781 = vpop.f32.mrb[0].mxu0
    %782 = vmatprep.mubr.bf16.mxu0 0
    %783 = vmatmul.mubr.bf16.gmra.mrb[0].mxu0 %v627
    %v784 = vpop.f32.mrb[0].mxu0
    %v785 = vadd.f32 0.0, %v784
    %v786 = vpop.f32.mrb[0].mxu0
    %v787 = vpop.f32.mrb[0].mxu0
    %v788 = vadd.f32 0.0, %v787
    %v789 = vpop.f32.mrb[0].mxu0
    %790 = vmatprep.mubr.bf16.mxu0 0
    %791 = vmatmul.mubr.bf16.gmra.mrb[0].mxu0 %v628
    %v792 = vpop.f32.mrb[0].mxu0
    %v793 = vadd.f32 0.0, %v792
    %v794 = vpop.f32.mrb[0].mxu0
    %v795 = vpop.f32.mrb[0].mxu0
    %v796 = vadd.f32 0.0, %v795
    %v797 = vpop.f32.mrb[0].mxu0
    %798 = vmatprep.mubr.bf16.mxu0 0
    %799 = vmatmul.mubr.bf16.gmra.mrb[0].mxu0 %v629
    %v800 = vpop.f32.mrb[0].mxu0
    %v801 = vadd.f32 0.0, %v800
    %v802 = vpop.f32.mrb[0].mxu0
    %v803 = vpop.f32.mrb[0].mxu0
    %v804 = vadd.f32 0.0, %v803
    %v805 = vpop.f32.mrb[0].mxu0
    %806 = vmatprep.mubr.bf16.mxu0 0
    %807 = vmatmul.mubr.bf16.gmra.mrb[0].mxu0 %v630
    %v808 = vpop.f32.mrb[0].mxu0
    %v809 = vadd.f32 0.0, %v808
    %v810 = vpop.f32.mrb[0].mxu0
    %v811 = vpop.f32.mrb[0].mxu0
    %v812 = vadd.f32 0.0, %v811
    %v813 = vpop.f32.mrb[0].mxu0
    %814 = vmatprep.mubr.bf16.mxu0 0
    %815 = vmatmul.mubr.bf16.gmra.mrb[0].mxu0 %v631
    %v816 = vpop.f32.mrb[0].mxu0
    %v817 = vadd.f32 0.0, %v816
    %v818 = vpop.f32.mrb[0].mxu0
    %v819 = vpop.f32.mrb[0].mxu0
    %v820 = vadd.f32 0.0, %v819
    %v821 = vpop.f32.mrb[0].mxu0
    %822 = vmatprep.mubr.bf16.mxu0 0
    %823 = vmatmul.mubr.bf16.gmra.mrb[0].mxu0 %v632
    %v824 = vpop.f32.mrb[0].mxu0
    %v825 = vadd.f32 0.0, %v824
    %v826 = vpop.f32.mrb[0].mxu0
    %v827 = vpop.f32.mrb[0].mxu0
    %v828 = vadd.f32 0.0, %v827
    %v829 = vpop.f32.mrb[0].mxu0
    %830 = vmatprep.mubr.bf16.mxu0 0
    %831 = vmatmul.mubr.bf16.gmra.mrb[0].mxu0 %v633
    %v832 = vpop.f32.mrb[0].mxu0
    %v833 = vadd.f32 0.0, %v832
    %v834 = vpop.f32.mrb[0].mxu0
    %v835 = vpop.f32.mrb[0].mxu0
    %v836 = vadd.f32 0.0, %v835
    %v837 = vpop.f32.mrb[0].mxu0
    %838 = vmatprep.mubr.bf16.mxu0 0
    %839 = vmatmul.mubr.bf16.gmra.mrb[0].mxu0 %v634
    %v840 = vpop.f32.mrb[0].mxu0
    %v841 = vadd.f32 0.0, %v840
    %v842 = vpop.f32.mrb[0].mxu0
    %v843 = vpop.f32.mrb[0].mxu0
    %v844 = vadd.f32 0.0, %v843
    %v845 = vpop.f32.mrb[0].mxu0
    %846 = vmatprep.mubr.bf16.mxu0 0
    %847 = vmatmul.mubr.bf16.gmra.mrb[0].mxu0 %v635
    %v848 = vpop.f32.mrb[0].mxu0
    %v849 = vadd.f32 0.0, %v848
    %v850 = vpop.f32.mrb[0].mxu0
    %v851 = vpop.f32.mrb[0].mxu0
    %v852 = vadd.f32 0.0, %v851
    %v853 = vpop.f32.mrb[0].mxu0
    %854 = vmatprep.mubr.bf16.mxu0 0
    %855 = vmatmul.mubr.bf16.gmra.mrb[0].mxu0 %v636
    %v856 = vpop.f32.mrb[0].mxu0
    %v857 = vadd.f32 0.0, %v856
    %v858 = vpop.f32.mrb[0].mxu0
    %v859 = vpop.f32.mrb[0].mxu0
    %v860 = vadd.f32 0.0, %v859
    %v861 = vpop.f32.mrb[0].mxu0
    %862 = vdwg.mxu0
    %v863 = vadd.f32 %v737, %v740
    %v864 = vadd.f32 %v863, %v745
    %v865 = vadd.f32 %v864, %v748
    %v866 = vadd.f32 %v865, %v753
    %v867 = vadd.f32 %v866, %v756
    %v868 = vadd.f32 %v867, %v761
    %v869 = vadd.f32 %v868, %v764
    %v870 = vadd.f32 %v869, %v769
    %v871 = vadd.f32 %v870, %v772
    %v872 = vadd.f32 %v871, %v777
    %v873 = vadd.f32 %v872, %v780
    %v874 = vadd.f32 %v873, %v785
    %v875 = vadd.f32 %v874, %v788
    %v876 = vadd.f32 %v875, %v793
    %v877 = vadd.f32 %v876, %v796
    %v878 = vadd.f32 %v877, %v801
    %v879 = vadd.f32 %v878, %v804
    %v880 = vadd.f32 %v879, %v809
    %v881 = vadd.f32 %v880, %v812
    %v882 = vadd.f32 %v881, %v817
    %v883 = vadd.f32 %v882, %v820
    %v884 = vadd.f32 %v883, %v825
    %v885 = vadd.f32 %v884, %v828
    %v886 = vadd.f32 %v885, %v833
    %v887 = vadd.f32 %v886, %v836
    %v888 = vadd.f32 %v887, %v841
    %v889 = vadd.f32 %v888, %v844
    %v890 = vadd.f32 %v889, %v849
    %v891 = vadd.f32 %v890, %v852
    %v892 = vadd.f32 %v891, %v857
    %v893 = vadd.f32 %v892, %v860
    %v894 = vrot.slane %v893, 4
    %v895 = vadd.f32 %v893, %v894
    %v896 = vrot.slane %v895, 2
    %v897 = vadd.f32 %v895, %v896
    %v898 = vrot.slane %v897, 1
    %v899 = vadd.f32 %v897, %v898
    %v900 = vmul.f32 %v737, %v737
    %v901 = vmul.f32 %v740, %v740
    %v902 = vmul.f32 %v745, %v745
    %v903 = vmul.f32 %v748, %v748
    %v904 = vmul.f32 %v753, %v753
    %v905 = vmul.f32 %v756, %v756
    %v906 = vmul.f32 %v761, %v761
    %v907 = vmul.f32 %v764, %v764
    %v908 = vmul.f32 %v769, %v769
    %v909 = vmul.f32 %v772, %v772
    %v910 = vmul.f32 %v777, %v777
    %v911 = vmul.f32 %v780, %v780
    %v912 = vmul.f32 %v785, %v785
    %v913 = vmul.f32 %v788, %v788
    %v914 = vmul.f32 %v793, %v793
    %v915 = vmul.f32 %v796, %v796
    %v916 = vmul.f32 %v801, %v801
    %v917 = vmul.f32 %v804, %v804
    %v918 = vmul.f32 %v809, %v809
    %v919 = vmul.f32 %v812, %v812
    %v920 = vmul.f32 %v817, %v817
    %v921 = vmul.f32 %v820, %v820
    %v922 = vmul.f32 %v825, %v825
    %v923 = vmul.f32 %v828, %v828
    %v924 = vmul.f32 %v833, %v833
    %v925 = vmul.f32 %v836, %v836
    %v926 = vmul.f32 %v841, %v841
    %v927 = vmul.f32 %v844, %v844
    %v928 = vmul.f32 %v849, %v849
    %v929 = vmul.f32 %v852, %v852
    %v930 = vmul.f32 %v857, %v857
    %v931 = vmul.f32 %v860, %v860
    %v932 = vadd.f32 %v900, %v901
    %v933 = vadd.f32 %v932, %v902
    %v934 = vadd.f32 %v933, %v903
    %v935 = vadd.f32 %v934, %v904
    %v936 = vadd.f32 %v935, %v905
    %v937 = vadd.f32 %v936, %v906
    %v938 = vadd.f32 %v937, %v907
    %v939 = vadd.f32 %v938, %v908
    %v940 = vadd.f32 %v939, %v909
    %v941 = vadd.f32 %v940, %v910
    %v942 = vadd.f32 %v941, %v911
    %v943 = vadd.f32 %v942, %v912
    %v944 = vadd.f32 %v943, %v913
    %v945 = vadd.f32 %v944, %v914
    %v946 = vadd.f32 %v945, %v915
    %v947 = vadd.f32 %v946, %v916
    %v948 = vadd.f32 %v947, %v917
    %v949 = vadd.f32 %v948, %v918
    %v950 = vadd.f32 %v949, %v919
    %v951 = vadd.f32 %v950, %v920
    %v952 = vadd.f32 %v951, %v921
    %v953 = vadd.f32 %v952, %v922
    %v954 = vadd.f32 %v953, %v923
    %v955 = vadd.f32 %v954, %v924
    %v956 = vadd.f32 %v955, %v925
    %v957 = vadd.f32 %v956, %v926
    %v958 = vadd.f32 %v957, %v927
    %v959 = vadd.f32 %v958, %v928
    %v960 = vadd.f32 %v959, %v929
    %v961 = vadd.f32 %v960, %v930
    %v962 = vadd.f32 %v961, %v931
    %v963 = vrot.slane %v962, 4
    %v964 = vadd.f32 %v962, %v963
    %v965 = vrot.slane %v964, 2
    %v966 = vadd.f32 %v964, %v965
    %v967 = vrot.slane %v966, 1
    %v968 = vadd.f32 %v966, %v967
    %v969 = vmul.f32 %v899, 0.00390625
    %v970 = vmul.f32 %v968, 0.00390625
    %v971 = vmul.f32 %v969, %v969
    %v972 = vsub.f32 %v970, %v971
    %v973 = vmax.f32 %v972, 0.0
    %s974 = scalar_lea.vmem %s2, 2
    %v975 = vld [vmem:[%s974] sm:$0x3]
    %v976 = vadd.f32 %v973, 1e-05
    %v977 = vrsqrt.pop %v976
    %v978 = vmul.f32 %v975, %v977
    %v979 = vmul.f32 %v969, %v978
    %v981 = vrot.slane %v979, 7
    %v983 = vsub.f32 %v975, %v981
    %v984 = vlaneseq
    %v985 = vshrl.u32 %v984, 7
    %v986 = vsub.s32 0, %v985
    %v987 = vrot.slane %v978, %v986
    %v988 = vmul.f32 %v737, %v987
    %v989 = vmul.f32 %v740, %v987
    %v990 = vmul.f32 %v745, %v987
    %v991 = vmul.f32 %v748, %v987
    %v992 = vmul.f32 %v753, %v987
    %v993 = vmul.f32 %v756, %v987
    %v994 = vmul.f32 %v761, %v987
    %v995 = vmul.f32 %v764, %v987
    %v996 = vmul.f32 %v769, %v987
    %v997 = vmul.f32 %v772, %v987
    %v998 = vmul.f32 %v777, %v987
    %v999 = vmul.f32 %v780, %v987
    %v1000 = vmul.f32 %v785, %v987
    %v1001 = vmul.f32 %v788, %v987
    %v1002 = vmul.f32 %v793, %v987
    %v1003 = vmul.f32 %v796, %v987
    %v1004 = vmul.f32 %v801, %v987
    %v1005 = vmul.f32 %v804, %v987
    %v1006 = vmul.f32 %v809, %v987
    %v1007 = vmul.f32 %v812, %v987
    %v1008 = vmul.f32 %v817, %v987
    %v1009 = vmul.f32 %v820, %v987
    %v1010 = vmul.f32 %v825, %v987
    %v1011 = vmul.f32 %v828, %v987
    %v1012 = vmul.f32 %v833, %v987
    %v1013 = vmul.f32 %v836, %v987
    %v1014 = vmul.f32 %v841, %v987
    %v1015 = vmul.f32 %v844, %v987
    %v1016 = vmul.f32 %v849, %v987
    %v1017 = vmul.f32 %v852, %v987
    %v1018 = vmul.f32 %v857, %v987
    %v1019 = vmul.f32 %v860, %v987
    %v1020 = vlaneseq
    %v1021 = vshrl.u32 %v1020, 7
    %v1022 = vsub.s32 1, %v1021
    %v1023 = vrot.slane %v983, %v1022
    %v1024 = vadd.f32 %v988, %v1023
    %v1025 = vadd.f32 %v989, %v1023
    %v1026 = vadd.f32 %v990, %v1023
    %v1027 = vadd.f32 %v991, %v1023
    %v1028 = vadd.f32 %v992, %v1023
    %v1029 = vadd.f32 %v993, %v1023
    %v1030 = vadd.f32 %v994, %v1023
    %v1031 = vadd.f32 %v995, %v1023
    %v1032 = vadd.f32 %v996, %v1023
    %v1033 = vadd.f32 %v997, %v1023
    %v1034 = vadd.f32 %v998, %v1023
    %v1035 = vadd.f32 %v999, %v1023
    %v1036 = vadd.f32 %v1000, %v1023
    %v1037 = vadd.f32 %v1001, %v1023
    %v1038 = vadd.f32 %v1002, %v1023
    %v1039 = vadd.f32 %v1003, %v1023
    %v1040 = vadd.f32 %v1004, %v1023
    %v1041 = vadd.f32 %v1005, %v1023
    %v1042 = vadd.f32 %v1006, %v1023
    %v1043 = vadd.f32 %v1007, %v1023
    %v1044 = vadd.f32 %v1008, %v1023
    %v1045 = vadd.f32 %v1009, %v1023
    %v1046 = vadd.f32 %v1010, %v1023
    %v1047 = vadd.f32 %v1011, %v1023
    %v1048 = vadd.f32 %v1012, %v1023
    %v1049 = vadd.f32 %v1013, %v1023
    %v1050 = vadd.f32 %v1014, %v1023
    %v1051 = vadd.f32 %v1015, %v1023
    %v1052 = vadd.f32 %v1016, %v1023
    %v1053 = vadd.f32 %v1017, %v1023
    %v1054 = vadd.f32 %v1018, %v1023
    %v1055 = vadd.f32 %v1019, %v1023
    %v1056 = vmax.f32 %v1024, 0.0
    %v1057 = vmax.f32 %v1025, 0.0
    %v1058 = vmax.f32 %v1026, 0.0
    %v1059 = vmax.f32 %v1027, 0.0
    %v1060 = vmax.f32 %v1028, 0.0
    %v1061 = vmax.f32 %v1029, 0.0
    %v1062 = vmax.f32 %v1030, 0.0
    %v1063 = vmax.f32 %v1031, 0.0
    %v1064 = vmax.f32 %v1032, 0.0
    %v1065 = vmax.f32 %v1033, 0.0
    %v1066 = vmax.f32 %v1034, 0.0
    %v1067 = vmax.f32 %v1035, 0.0
    %v1068 = vmax.f32 %v1036, 0.0
    %v1069 = vmax.f32 %v1037, 0.0
    %v1070 = vmax.f32 %v1038, 0.0
    %v1071 = vmax.f32 %v1039, 0.0
    %v1072 = vmax.f32 %v1040, 0.0
    %v1073 = vmax.f32 %v1041, 0.0
    %v1074 = vmax.f32 %v1042, 0.0
    %v1075 = vmax.f32 %v1043, 0.0
    %v1076 = vmax.f32 %v1044, 0.0
    %v1077 = vmax.f32 %v1045, 0.0
    %v1078 = vmax.f32 %v1046, 0.0
    %v1079 = vmax.f32 %v1047, 0.0
    %v1080 = vmax.f32 %v1048, 0.0
    %v1081 = vmax.f32 %v1049, 0.0
    %v1082 = vmax.f32 %v1050, 0.0
    %v1083 = vmax.f32 %v1051, 0.0
    %v1084 = vmax.f32 %v1052, 0.0
    %v1085 = vmax.f32 %v1053, 0.0
    %v1086 = vmax.f32 %v1054, 0.0
    %v1087 = vmax.f32 %v1055, 0.0
    %v1088 = vpack.c.bf16 %v1057, %v1056
    %v1089 = vpack.c.bf16 %v1059, %v1058
    %v1090 = vpack.c.bf16 %v1061, %v1060
    %v1091 = vpack.c.bf16 %v1063, %v1062
    %v1092 = vpack.c.bf16 %v1065, %v1064
    %v1093 = vpack.c.bf16 %v1067, %v1066
    %v1094 = vpack.c.bf16 %v1069, %v1068
    %v1095 = vpack.c.bf16 %v1071, %v1070
    %v1096 = vpack.c.bf16 %v1073, %v1072
    %v1097 = vpack.c.bf16 %v1075, %v1074
    %v1098 = vpack.c.bf16 %v1077, %v1076
    %v1099 = vpack.c.bf16 %v1079, %v1078
    %v1100 = vpack.c.bf16 %v1081, %v1080
    %v1101 = vpack.c.bf16 %v1083, %v1082
    %v1102 = vpack.c.bf16 %v1085, %v1084
    %v1103 = vpack.c.bf16 %v1087, %v1086
    %s1104 = scalar_lea.vmem [#allocation5], 128
    %v1105 = vld [vmem:[%s1104] sm:$0xf]
    %v1106 = vld [vmem:[%s1104 + $0x4] sm:$0xf]
    %v1107 = vld [vmem:[%s1104 + $0x8] sm:$0xf]
    %v1108 = vld [vmem:[%s1104 + $0xc] sm:$0xf]
    %v1109 = vld [vmem:[%s1104 + $0x10] sm:$0xf]
    %v1110 = vld [vmem:[%s1104 + $0x14] sm:$0xf]
    %v1111 = vld [vmem:[%s1104 + $0x18] sm:$0xf]
    %v1112 = vld [vmem:[%s1104 + $0x1c] sm:$0xf]
    %v1113 = vld [vmem:[%s1104 + $0x20] sm:$0xf]
    %v1114 = vld [vmem:[%s1104 + $0x24] sm:$0xf]
    %v1115 = vld [vmem:[%s1104 + $0x28] sm:$0xf]
    %v1116 = vld [vmem:[%s1104 + $0x2c] sm:$0xf]
    %v1117 = vld [vmem:[%s1104 + $0x30] sm:$0xf]
    %v1118 = vld [vmem:[%s1104 + $0x34] sm:$0xf]
    %v1119 = vld [vmem:[%s1104 + $0x38] sm:$0xf]
    %v1120 = vld [vmem:[%s1104 + $0x3c] sm:$0xf]
    %v1137 = vunpack.c.l.b16 %v1105
    %v1138 = vunpack.c.l.b16 %v1106
    %v1139 = vunpack.c.l.b16 %v1107
    %v1140 = vunpack.c.l.b16 %v1108
    %v1141 = vunpack.c.l.b16 %v1109
    %v1142 = vunpack.c.l.b16 %v1110
    %v1143 = vunpack.c.l.b16 %v1111
    %v1144 = vunpack.c.l.b16 %v1112
    %v1145 = vunpack.c.l.b16 %v1113
    %v1146 = vunpack.c.l.b16 %v1114
    %v1147 = vunpack.c.l.b16 %v1115
    %v1148 = vunpack.c.l.b16 %v1116
    %v1149 = vunpack.c.l.b16 %v1117
    %v1150 = vunpack.c.l.b16 %v1118
    %v1151 = vunpack.c.l.b16 %v1119
    %v1152 = vunpack.c.l.b16 %v1120
    %v1153 = vpack.c.b16 %v1138, %v1137
    %v1154 = vpack.c.b16 %v1140, %v1139
    %v1155 = vpack.c.b16 %v1142, %v1141
    %v1156 = vpack.c.b16 %v1144, %v1143
    %v1157 = vpack.c.b16 %v1146, %v1145
    %v1158 = vpack.c.b16 %v1148, %v1147
    %v1159 = vpack.c.b16 %v1150, %v1149
    %v1160 = vpack.c.b16 %v1152, %v1151
    %1169 = vmatprep.subr.bf16.mxu0 0
    %1170 = vmatpush1.bf16.msra.mxu0 %v1153
    %1171 = vmatprep.subr.bf16.mxu0 0
    %1172 = vmatpush1.bf16.msra.mxu0 %v1154
    %1173 = vmatprep.subr.bf16.mxu0 0
    %1174 = vmatpush1.bf16.msra.mxu0 %v1155
    %1175 = vmatprep.subr.bf16.mxu0 0
    %1176 = vmatpush1.bf16.msra.mxu0 %v1156
    %1177 = vmatprep.subr.bf16.mxu0 0
    %1178 = vmatpush1.bf16.msra.mxu0 %v1157
    %1179 = vmatprep.subr.bf16.mxu0 0
    %1180 = vmatpush1.bf16.msra.mxu0 %v1158
    %1181 = vmatprep.subr.bf16.mxu0 0
    %1182 = vmatpush1.bf16.msra.mxu0 %v1159
    %1183 = vmatprep.subr.bf16.mxu0 0
    %1184 = vmatpush1.bf16.msra.mxu0 %v1160
    %1185 = vmatprep.subr.bf16.mxu0 0
    %1186 = vmatpush1.bf16.msra.mxu0 0
    %1187 = vmatprep.subr.bf16.mxu0 0
    %1188 = vmatpush1.bf16.msra.mxu0 0
    %1189 = vmatprep.subr.bf16.mxu0 0
    %1190 = vmatpush1.bf16.msra.mxu0 0
    %1191 = vmatprep.subr.bf16.mxu0 0
    %1192 = vmatpush1.bf16.msra.mxu0 0
    %1193 = vmatprep.subr.bf16.mxu0 0
    %1194 = vmatpush1.bf16.msra.mxu0 0
    %1195 = vmatprep.subr.bf16.mxu0 0
    %1196 = vmatpush1.bf16.msra.mxu0 0
    %1197 = vmatprep.subr.bf16.mxu0 0
    %1198 = vmatpush1.bf16.msra.mxu0 0
    %1199 = vmatprep.subr.bf16.mxu0 0
    %1200 = vmatpush1.bf16.msra.mxu0 0
    %1201 = vmatprep.mubr.bf16.mxu0 0
    %1202 = vmatmul.mubr.bf16.gmra.mrb[0].mxu0 %v1088
    %v1203 = vpop.f32.mrb[0].mxu0
    %v1204 = vadd.f32 0.0, %v1203
    %v1205 = vpop.f32.mrb[0].mxu0
    %v1206 = vpop.f32.mrb[0].mxu0
    %v1207 = vadd.f32 0.0, %v1206
    %v1208 = vpop.f32.mrb[0].mxu0
    %1209 = vmatprep.mubr.bf16.mxu0 0
    %1210 = vmatmul.mubr.bf16.gmra.mrb[0].mxu0 %v1089
    %v1211 = vpop.f32.mrb[0].mxu0
    %v1212 = vadd.f32 0.0, %v1211
    %v1213 = vpop.f32.mrb[0].mxu0
    %v1214 = vpop.f32.mrb[0].mxu0
    %v1215 = vadd.f32 0.0, %v1214
    %v1216 = vpop.f32.mrb[0].mxu0
    %1217 = vmatprep.mubr.bf16.mxu0 0
    %1218 = vmatmul.mubr.bf16.gmra.mrb[0].mxu0 %v1090
    %v1219 = vpop.f32.mrb[0].mxu0
    %v1220 = vadd.f32 0.0, %v1219
    %v1221 = vpop.f32.mrb[0].mxu0
    %v1222 = vpop.f32.mrb[0].mxu0
    %v1223 = vadd.f32 0.0, %v1222
    %v1224 = vpop.f32.mrb[0].mxu0
    %1225 = vmatprep.mubr.bf16.mxu0 0
    %1226 = vmatmul.mubr.bf16.gmra.mrb[0].mxu0 %v1091
    %v1227 = vpop.f32.mrb[0].mxu0
    %v1228 = vadd.f32 0.0, %v1227
    %v1229 = vpop.f32.mrb[0].mxu0
    %v1230 = vpop.f32.mrb[0].mxu0
    %v1231 = vadd.f32 0.0, %v1230
    %v1232 = vpop.f32.mrb[0].mxu0
    %1233 = vmatprep.mubr.bf16.mxu0 0
    %1234 = vmatmul.mubr.bf16.gmra.mrb[0].mxu0 %v1092
    %v1235 = vpop.f32.mrb[0].mxu0
    %v1236 = vadd.f32 0.0, %v1235
    %v1237 = vpop.f32.mrb[0].mxu0
    %v1238 = vpop.f32.mrb[0].mxu0
    %v1239 = vadd.f32 0.0, %v1238
    %v1240 = vpop.f32.mrb[0].mxu0
    %1241 = vmatprep.mubr.bf16.mxu0 0
    %1242 = vmatmul.mubr.bf16.gmra.mrb[0].mxu0 %v1093
    %v1243 = vpop.f32.mrb[0].mxu0
    %v1244 = vadd.f32 0.0, %v1243
    %v1245 = vpop.f32.mrb[0].mxu0
    %v1246 = vpop.f32.mrb[0].mxu0
    %v1247 = vadd.f32 0.0, %v1246
    %v1248 = vpop.f32.mrb[0].mxu0
    %1249 = vmatprep.mubr.bf16.mxu0 0
    %1250 = vmatmul.mubr.bf16.gmra.mrb[0].mxu0 %v1094
    %v1251 = vpop.f32.mrb[0].mxu0
    %v1252 = vadd.f32 0.0, %v1251
    %v1253 = vpop.f32.mrb[0].mxu0
    %v1254 = vpop.f32.mrb[0].mxu0
    %v1255 = vadd.f32 0.0, %v1254
    %v1256 = vpop.f32.mrb[0].mxu0
    %1257 = vmatprep.mubr.bf16.mxu0 0
    %1258 = vmatmul.mubr.bf16.gmra.mrb[0].mxu0 %v1095
    %v1259 = vpop.f32.mrb[0].mxu0
    %v1260 = vadd.f32 0.0, %v1259
    %v1261 = vpop.f32.mrb[0].mxu0
    %v1262 = vpop.f32.mrb[0].mxu0
    %v1263 = vadd.f32 0.0, %v1262
    %v1264 = vpop.f32.mrb[0].mxu0
    %1265 = vmatprep.mubr.bf16.mxu0 0
    %1266 = vmatmul.mubr.bf16.gmra.mrb[0].mxu0 %v1096
    %v1267 = vpop.f32.mrb[0].mxu0
    %v1268 = vadd.f32 0.0, %v1267
    %v1269 = vpop.f32.mrb[0].mxu0
    %v1270 = vpop.f32.mrb[0].mxu0
    %v1271 = vadd.f32 0.0, %v1270
    %v1272 = vpop.f32.mrb[0].mxu0
    %1273 = vmatprep.mubr.bf16.mxu0 0
    %1274 = vmatmul.mubr.bf16.gmra.mrb[0].mxu0 %v1097
    %v1275 = vpop.f32.mrb[0].mxu0
    %v1276 = vadd.f32 0.0, %v1275
    %v1277 = vpop.f32.mrb[0].mxu0
    %v1278 = vpop.f32.mrb[0].mxu0
    %v1279 = vadd.f32 0.0, %v1278
    %v1280 = vpop.f32.mrb[0].mxu0
    %1281 = vmatprep.mubr.bf16.mxu0 0
    %1282 = vmatmul.mubr.bf16.gmra.mrb[0].mxu0 %v1098
    %v1283 = vpop.f32.mrb[0].mxu0
    %v1284 = vadd.f32 0.0, %v1283
    %v1285 = vpop.f32.mrb[0].mxu0
    %v1286 = vpop.f32.mrb[0].mxu0
    %v1287 = vadd.f32 0.0, %v1286
    %v1288 = vpop.f32.mrb[0].mxu0
    %1289 = vmatprep.mubr.bf16.mxu0 0
    %1290 = vmatmul.mubr.bf16.gmra.mrb[0].mxu0 %v1099
    %v1291 = vpop.f32.mrb[0].mxu0
    %v1292 = vadd.f32 0.0, %v1291
    %v1293 = vpop.f32.mrb[0].mxu0
    %v1294 = vpop.f32.mrb[0].mxu0
    %v1295 = vadd.f32 0.0, %v1294
    %v1296 = vpop.f32.mrb[0].mxu0
    %1297 = vmatprep.mubr.bf16.mxu0 0
    %1298 = vmatmul.mubr.bf16.gmra.mrb[0].mxu0 %v1100
    %v1299 = vpop.f32.mrb[0].mxu0
    %v1300 = vadd.f32 0.0, %v1299
    %v1301 = vpop.f32.mrb[0].mxu0
    %v1302 = vpop.f32.mrb[0].mxu0
    %v1303 = vadd.f32 0.0, %v1302
    %v1304 = vpop.f32.mrb[0].mxu0
    %1305 = vmatprep.mubr.bf16.mxu0 0
    %1306 = vmatmul.mubr.bf16.gmra.mrb[0].mxu0 %v1101
    %v1307 = vpop.f32.mrb[0].mxu0
    %v1308 = vadd.f32 0.0, %v1307
    %v1309 = vpop.f32.mrb[0].mxu0
    %v1310 = vpop.f32.mrb[0].mxu0
    %v1311 = vadd.f32 0.0, %v1310
    %v1312 = vpop.f32.mrb[0].mxu0
    %1313 = vmatprep.mubr.bf16.mxu0 0
    %1314 = vmatmul.mubr.bf16.gmra.mrb[0].mxu0 %v1102
    %v1315 = vpop.f32.mrb[0].mxu0
    %v1316 = vadd.f32 0.0, %v1315
    %v1317 = vpop.f32.mrb[0].mxu0
    %v1318 = vpop.f32.mrb[0].mxu0
    %v1319 = vadd.f32 0.0, %v1318
    %v1320 = vpop.f32.mrb[0].mxu0
    %1321 = vmatprep.mubr.bf16.mxu0 0
    %1322 = vmatmul.mubr.bf16.gmra.mrb[0].mxu0 %v1103
    %v1323 = vpop.f32.mrb[0].mxu0
    %v1324 = vadd.f32 0.0, %v1323
    %v1325 = vpop.f32.mrb[0].mxu0
    %v1326 = vpop.f32.mrb[0].mxu0
    %v1327 = vadd.f32 0.0, %v1326
    %v1328 = vpop.f32.mrb[0].mxu0
    %1329 = vdwg.mxu0
    %v1330 = vadd.f32 %v1204, %v1207
    %v1331 = vadd.f32 %v1330, %v1212
    %v1332 = vadd.f32 %v1331, %v1215
    %v1333 = vadd.f32 %v1332, %v1220
    %v1334 = vadd.f32 %v1333, %v1223
    %v1335 = vadd.f32 %v1334, %v1228
    %v1336 = vadd.f32 %v1335, %v1231
    %v1337 = vadd.f32 %v1336, %v1236
    %v1338 = vadd.f32 %v1337, %v1239
    %v1339 = vadd.f32 %v1338, %v1244
    %v1340 = vadd.f32 %v1339, %v1247
    %v1341 = vadd.f32 %v1340, %v1252
    %v1342 = vadd.f32 %v1341, %v1255
    %v1343 = vadd.f32 %v1342, %v1260
    %v1344 = vadd.f32 %v1343, %v1263
    %v1345 = vadd.f32 %v1344, %v1268
    %v1346 = vadd.f32 %v1345, %v1271
    %v1347 = vadd.f32 %v1346, %v1276
    %v1348 = vadd.f32 %v1347, %v1279
    %v1349 = vadd.f32 %v1348, %v1284
    %v1350 = vadd.f32 %v1349, %v1287
    %v1351 = vadd.f32 %v1350, %v1292
    %v1352 = vadd.f32 %v1351, %v1295
    %v1353 = vadd.f32 %v1352, %v1300
    %v1354 = vadd.f32 %v1353, %v1303
    %v1355 = vadd.f32 %v1354, %v1308
    %v1356 = vadd.f32 %v1355, %v1311
    %v1357 = vadd.f32 %v1356, %v1316
    %v1358 = vadd.f32 %v1357, %v1319
    %v1359 = vadd.f32 %v1358, %v1324
    %v1360 = vadd.f32 %v1359, %v1327
    %v1361 = vrot.slane %v1360, 4
    %v1362 = vadd.f32 %v1360, %v1361
    %v1363 = vrot.slane %v1362, 2
    %v1364 = vadd.f32 %v1362, %v1363
    %v1365 = vrot.slane %v1364, 1
    %v1366 = vadd.f32 %v1364, %v1365
    %v1367 = vmul.f32 %v1204, %v1204
    %v1368 = vmul.f32 %v1207, %v1207
    %v1369 = vmul.f32 %v1212, %v1212
    %v1370 = vmul.f32 %v1215, %v1215
    %v1371 = vmul.f32 %v1220, %v1220
    %v1372 = vmul.f32 %v1223, %v1223
    %v1373 = vmul.f32 %v1228, %v1228
    %v1374 = vmul.f32 %v1231, %v1231
    %v1375 = vmul.f32 %v1236, %v1236
    %v1376 = vmul.f32 %v1239, %v1239
    %v1377 = vmul.f32 %v1244, %v1244
    %v1378 = vmul.f32 %v1247, %v1247
    %v1379 = vmul.f32 %v1252, %v1252
    %v1380 = vmul.f32 %v1255, %v1255
    %v1381 = vmul.f32 %v1260, %v1260
    %v1382 = vmul.f32 %v1263, %v1263
    %v1383 = vmul.f32 %v1268, %v1268
    %v1384 = vmul.f32 %v1271, %v1271
    %v1385 = vmul.f32 %v1276, %v1276
    %v1386 = vmul.f32 %v1279, %v1279
    %v1387 = vmul.f32 %v1284, %v1284
    %v1388 = vmul.f32 %v1287, %v1287
    %v1389 = vmul.f32 %v1292, %v1292
    %v1390 = vmul.f32 %v1295, %v1295
    %v1391 = vmul.f32 %v1300, %v1300
    %v1392 = vmul.f32 %v1303, %v1303
    %v1393 = vmul.f32 %v1308, %v1308
    %v1394 = vmul.f32 %v1311, %v1311
    %v1395 = vmul.f32 %v1316, %v1316
    %v1396 = vmul.f32 %v1319, %v1319
    %v1397 = vmul.f32 %v1324, %v1324
    %v1398 = vmul.f32 %v1327, %v1327
    %v1399 = vadd.f32 %v1367, %v1368
    %v1400 = vadd.f32 %v1399, %v1369
    %v1401 = vadd.f32 %v1400, %v1370
    %v1402 = vadd.f32 %v1401, %v1371
    %v1403 = vadd.f32 %v1402, %v1372
    %v1404 = vadd.f32 %v1403, %v1373
    %v1405 = vadd.f32 %v1404, %v1374
    %v1406 = vadd.f32 %v1405, %v1375
    %v1407 = vadd.f32 %v1406, %v1376
    %v1408 = vadd.f32 %v1407, %v1377
    %v1409 = vadd.f32 %v1408, %v1378
    %v1410 = vadd.f32 %v1409, %v1379
    %v1411 = vadd.f32 %v1410, %v1380
    %v1412 = vadd.f32 %v1411, %v1381
    %v1413 = vadd.f32 %v1412, %v1382
    %v1414 = vadd.f32 %v1413, %v1383
    %v1415 = vadd.f32 %v1414, %v1384
    %v1416 = vadd.f32 %v1415, %v1385
    %v1417 = vadd.f32 %v1416, %v1386
    %v1418 = vadd.f32 %v1417, %v1387
    %v1419 = vadd.f32 %v1418, %v1388
    %v1420 = vadd.f32 %v1419, %v1389
    %v1421 = vadd.f32 %v1420, %v1390
    %v1422 = vadd.f32 %v1421, %v1391
    %v1423 = vadd.f32 %v1422, %v1392
    %v1424 = vadd.f32 %v1423, %v1393
    %v1425 = vadd.f32 %v1424, %v1394
    %v1426 = vadd.f32 %v1425, %v1395
    %v1427 = vadd.f32 %v1426, %v1396
    %v1428 = vadd.f32 %v1427, %v1397
    %v1429 = vadd.f32 %v1428, %v1398
    %v1430 = vrot.slane %v1429, 4
    %v1431 = vadd.f32 %v1429, %v1430
    %v1432 = vrot.slane %v1431, 2
    %v1433 = vadd.f32 %v1431, %v1432
    %v1434 = vrot.slane %v1433, 1
    %v1435 = vadd.f32 %v1433, %v1434
    %v1436 = vmul.f32 %v1366, 0.00390625
    %v1437 = vmul.f32 %v1435, 0.00390625
    %v1438 = vmul.f32 %v1436, %v1436
    %v1439 = vsub.f32 %v1437, %v1438
    %v1440 = vmax.f32 %v1439, 0.0
    %s1441 = scalar_lea.vmem %s2, 4
    %v1442 = vld [vmem:[%s1441] sm:$0x3]
    %v1443 = vadd.f32 %v1440, 1e-05
    %v1444 = vrsqrt.pop %v1443
    %v1445 = vmul.f32 %v1442, %v1444
    %v1446 = vmul.f32 %v1436, %v1445
    %v1448 = vrot.slane %v1446, 7
    %v1450 = vsub.f32 %v1442, %v1448
    %v1451 = vlaneseq
    %v1452 = vshrl.u32 %v1451, 7
    %v1453 = vsub.s32 0, %v1452
    %v1454 = vrot.slane %v1445, %v1453
    %v1455 = vmul.f32 %v1204, %v1454
    %v1456 = vmul.f32 %v1207, %v1454
    %v1457 = vmul.f32 %v1212, %v1454
    %v1458 = vmul.f32 %v1215, %v1454
    %v1459 = vmul.f32 %v1220, %v1454
    %v1460 = vmul.f32 %v1223, %v1454
    %v1461 = vmul.f32 %v1228, %v1454
    %v1462 = vmul.f32 %v1231, %v1454
    %v1463 = vmul.f32 %v1236, %v1454
    %v1464 = vmul.f32 %v1239, %v1454
    %v1465 = vmul.f32 %v1244, %v1454
    %v1466 = vmul.f32 %v1247, %v1454
    %v1467 = vmul.f32 %v1252, %v1454
    %v1468 = vmul.f32 %v1255, %v1454
    %v1469 = vmul.f32 %v1260, %v1454
    %v1470 = vmul.f32 %v1263, %v1454
    %v1471 = vmul.f32 %v1268, %v1454
    %v1472 = vmul.f32 %v1271, %v1454
    %v1473 = vmul.f32 %v1276, %v1454
    %v1474 = vmul.f32 %v1279, %v1454
    %v1475 = vmul.f32 %v1284, %v1454
    %v1476 = vmul.f32 %v1287, %v1454
    %v1477 = vmul.f32 %v1292, %v1454
    %v1478 = vmul.f32 %v1295, %v1454
    %v1479 = vmul.f32 %v1300, %v1454
    %v1480 = vmul.f32 %v1303, %v1454
    %v1481 = vmul.f32 %v1308, %v1454
    %v1482 = vmul.f32 %v1311, %v1454
    %v1483 = vmul.f32 %v1316, %v1454
    %v1484 = vmul.f32 %v1319, %v1454
    %v1485 = vmul.f32 %v1324, %v1454
    %v1486 = vmul.f32 %v1327, %v1454
    %v1487 = vlaneseq
    %v1488 = vshrl.u32 %v1487, 7
    %v1489 = vsub.s32 1, %v1488
    %v1490 = vrot.slane %v1450, %v1489
    %v1491 = vadd.f32 %v1455, %v1490
    %v1492 = vadd.f32 %v1456, %v1490
    %v1493 = vadd.f32 %v1457, %v1490
    %v1494 = vadd.f32 %v1458, %v1490
    %v1495 = vadd.f32 %v1459, %v1490
    %v1496 = vadd.f32 %v1460, %v1490
    %v1497 = vadd.f32 %v1461, %v1490
    %v1498 = vadd.f32 %v1462, %v1490
    %v1499 = vadd.f32 %v1463, %v1490
    %v1500 = vadd.f32 %v1464, %v1490
    %v1501 = vadd.f32 %v1465, %v1490
    %v1502 = vadd.f32 %v1466, %v1490
    %v1503 = vadd.f32 %v1467, %v1490
    %v1504 = vadd.f32 %v1468, %v1490
    %v1505 = vadd.f32 %v1469, %v1490
    %v1506 = vadd.f32 %v1470, %v1490
    %v1507 = vadd.f32 %v1471, %v1490
    %v1508 = vadd.f32 %v1472, %v1490
    %v1509 = vadd.f32 %v1473, %v1490
    %v1510 = vadd.f32 %v1474, %v1490
    %v1511 = vadd.f32 %v1475, %v1490
    %v1512 = vadd.f32 %v1476, %v1490
    %v1513 = vadd.f32 %v1477, %v1490
    %v1514 = vadd.f32 %v1478, %v1490
    %v1515 = vadd.f32 %v1479, %v1490
    %v1516 = vadd.f32 %v1480, %v1490
    %v1517 = vadd.f32 %v1481, %v1490
    %v1518 = vadd.f32 %v1482, %v1490
    %v1519 = vadd.f32 %v1483, %v1490
    %v1520 = vadd.f32 %v1484, %v1490
    %v1521 = vadd.f32 %v1485, %v1490
    %v1522 = vadd.f32 %v1486, %v1490
    %v1523 = vmax.f32 %v1491, 0.0
    %v1524 = vmax.f32 %v1492, 0.0
    %v1525 = vmax.f32 %v1493, 0.0
    %v1526 = vmax.f32 %v1494, 0.0
    %v1527 = vmax.f32 %v1495, 0.0
    %v1528 = vmax.f32 %v1496, 0.0
    %v1529 = vmax.f32 %v1497, 0.0
    %v1530 = vmax.f32 %v1498, 0.0
    %v1531 = vmax.f32 %v1499, 0.0
    %v1532 = vmax.f32 %v1500, 0.0
    %v1533 = vmax.f32 %v1501, 0.0
    %v1534 = vmax.f32 %v1502, 0.0
    %v1535 = vmax.f32 %v1503, 0.0
    %v1536 = vmax.f32 %v1504, 0.0
    %v1537 = vmax.f32 %v1505, 0.0
    %v1538 = vmax.f32 %v1506, 0.0
    %v1539 = vmax.f32 %v1507, 0.0
    %v1540 = vmax.f32 %v1508, 0.0
    %v1541 = vmax.f32 %v1509, 0.0
    %v1542 = vmax.f32 %v1510, 0.0
    %v1543 = vmax.f32 %v1511, 0.0
    %v1544 = vmax.f32 %v1512, 0.0
    %v1545 = vmax.f32 %v1513, 0.0
    %v1546 = vmax.f32 %v1514, 0.0
    %v1547 = vmax.f32 %v1515, 0.0
    %v1548 = vmax.f32 %v1516, 0.0
    %v1549 = vmax.f32 %v1517, 0.0
    %v1550 = vmax.f32 %v1518, 0.0
    %v1551 = vmax.f32 %v1519, 0.0
    %v1552 = vmax.f32 %v1520, 0.0
    %v1553 = vmax.f32 %v1521, 0.0
    %v1554 = vmax.f32 %v1522, 0.0
    %1555 = vst [vmem:[#allocation7] sm:$0xff] %v1523
    %1556 = vst [vmem:[#allocation7 + $0x8] sm:$0xff] %v1524
    %1557 = vst [vmem:[#allocation7 + $0x10] sm:$0xff] %v1525
    %1558 = vst [vmem:[#allocation7 + $0x18] sm:$0xff] %v1526
    %1559 = vst [vmem:[#allocation7 + $0x20] sm:$0xff] %v1527
    %1560 = vst [vmem:[#allocation7 + $0x28] sm:$0xff] %v1528
    %1561 = vst [vmem:[#allocation7 + $0x30] sm:$0xff] %v1529
    %1562 = vst [vmem:[#allocation7 + $0x38] sm:$0xff] %v1530
    %1563 = vst [vmem:[#allocation7 + $0x40] sm:$0xff] %v1531
    %1564 = vst [vmem:[#allocation7 + $0x48] sm:$0xff] %v1532
    %1565 = vst [vmem:[#allocation7 + $0x50] sm:$0xff] %v1533
    %1566 = vst [vmem:[#allocation7 + $0x58] sm:$0xff] %v1534
    %1567 = vst [vmem:[#allocation7 + $0x60] sm:$0xff] %v1535
    %1568 = vst [vmem:[#allocation7 + $0x68] sm:$0xff] %v1536
    %1569 = vst [vmem:[#allocation7 + $0x70] sm:$0xff] %v1537
    %1570 = vst [vmem:[#allocation7 + $0x78] sm:$0xff] %v1538
    %1571 = vst [vmem:[#allocation7 + $0x80] sm:$0xff] %v1539
    %1572 = vst [vmem:[#allocation7 + $0x88] sm:$0xff] %v1540
    %1573 = vst [vmem:[#allocation7 + $0x90] sm:$0xff] %v1541
    %1574 = vst [vmem:[#allocation7 + $0x98] sm:$0xff] %v1542
    %1575 = vst [vmem:[#allocation7 + $0xa0] sm:$0xff] %v1543
    %1576 = vst [vmem:[#allocation7 + $0xa8] sm:$0xff] %v1544
    %1577 = vst [vmem:[#allocation7 + $0xb0] sm:$0xff] %v1545
    %1578 = vst [vmem:[#allocation7 + $0xb8] sm:$0xff] %v1546
    %1579 = vst [vmem:[#allocation7 + $0xc0] sm:$0xff] %v1547
    %1580 = vst [vmem:[#allocation7 + $0xc8] sm:$0xff] %v1548
    %1581 = vst [vmem:[#allocation7 + $0xd0] sm:$0xff] %v1549
    %1582 = vst [vmem:[#allocation7 + $0xd8] sm:$0xff] %v1550
    %1583 = vst [vmem:[#allocation7 + $0xe0] sm:$0xff] %v1551
    %1584 = vst [vmem:[#allocation7 + $0xe8] sm:$0xff] %v1552
    %1585 = vst [vmem:[#allocation7 + $0xf0] sm:$0xff] %v1553
    %1586 = vst [vmem:[#allocation7 + $0xf8] sm:$0xff] %v1554
    // Predicated region
    $region22: #{tpu_custom_call.1} parent=1 // pred_check
      _
    $region23: #{tpu_custom_call.1} parent=1 // pred_check_branch
      %1588 = sbr.rel (0) target = $region25
    $region24: #{tpu_custom_call.1} parent=1 // pred_region
      %s1590 = ssub.s32 4096, 4096
      %1591 = vsyncadd [#allocation4], %s1590
      %s1592 = sshll.u32 [#allocation7], 4
      %s1593 = int_to_ptr.vmem [resolvable:$true] %s1592
      %1598 = dma.vmem_to_hbm [thread:$0]  %s1593, 4096, %s3, [#allocation4], 128, 128, 8
    $region25: #{tpu_custom_call.1} parent=1 // pred_fallthru
      _
    // Predicated region
    $region26: #{tpu_custom_call.1} parent=1 // pred_check
      _
    $region27: #{tpu_custom_call.1} parent=1 // pred_check_branch
      %1600 = sbr.rel (0) target = $region29
    $region28: #{tpu_custom_call.1} parent=1 // pred_region
      %1601 = dma.done [#allocation4], 4096
    $region29: #{tpu_custom_call.1} parent=1 // pred_fallthru
      _
    %1602 = vsyncpa [#allocation3], 1
    %1603 = vsyncpa [#allocation6], 1
    %1604 = vsyncpa [#allocation4], 1

</llo_original>
